<compile_context>
chip_gen: v7x
topology: tpu7x:2x2x1
jax: 0.10.0
libtpu: 0.0.40
codegen_flags: <defaults>
</compile_context>

<pallas_src>
import jax
import jax.numpy as jnp
from jax.experimental import pallas as pl
from jax.experimental.pallas import tpu as pltpu

_LANE = 128
_SUBLANE = 8


def _mlp_kernel(x_ref, w1_ref, b1_ref, w2_ref, b2_ref,
                w3_ref, b3_ref, w4_ref, b4_ref, o_ref):
    # Layer 1: Linear + ReLU (bf16 operands, f32 accumulate)
    h = jnp.dot(x_ref[...], w1_ref[...],
                preferred_element_type=jnp.float32) + b1_ref[...]
    h = jnp.maximum(h, 0.0).astype(w2_ref.dtype)
    # Layer 2: Linear + ReLU
    h = jnp.dot(h, w2_ref[...],
                preferred_element_type=jnp.float32) + b2_ref[...]
    h = jnp.maximum(h, 0.0).astype(w3_ref.dtype)
    # Layer 3: Linear + ReLU
    h = jnp.dot(h, w3_ref[...],
                preferred_element_type=jnp.float32) + b3_ref[...]
    h = jnp.maximum(h, 0.0).astype(w4_ref.dtype)
    # Output layer: Linear (no activation); lane-dense (128-wide padded) store.
    out = jnp.dot(h, w4_ref[...],
                  preferred_element_type=jnp.float32) + b4_ref[...]
    o_ref[...] = out.astype(o_ref.dtype)


def _round_up(x, m):
    return ((x + m - 1) // m) * m


def mlp_forward(x, params, *, tb=256, vmem_limit_bytes=32 * 1024 * 1024):
    """x: [B, input_size] f32. params: w1..w4 ([in,out]) and b1..b4 ([1,out])."""
    B, in_size = x.shape
    out_size = params["w4"].shape[1]

    # ---- batch tiling: fixed tile (multiple of 8), many grid steps ----------
    tb = max(_SUBLANE, min(_round_up(tb, _SUBLANE), _round_up(B, _SUBLANE)))
    n_steps = pl.cdiv(B, tb)
    b_pad = n_steps * tb
    if b_pad != B:
        x = jnp.pad(x, ((0, b_pad - B), (0, 0)))  # tail rows masked off later

    # ---- lane-dense output: pad final layer to a multiple of 128 columns ----
    out_pad = _round_up(out_size, _LANE)
    w4 = params["w4"]
    b4 = params["b4"]
    if out_pad != out_size:
        w4 = jnp.pad(w4, ((0, 0), (0, out_pad - out_size)))
        b4 = jnp.pad(b4, ((0, 0), (0, out_pad - out_size)))

    # ---- bf16 operands for the MXU; f32 biases / accumulation ---------------
    x_bf = x.astype(jnp.bfloat16)
    w1 = params["w1"].astype(jnp.bfloat16)
    w2 = params["w2"].astype(jnp.bfloat16)
    w3 = params["w3"].astype(jnp.bfloat16)
    w4 = w4.astype(jnp.bfloat16)
    b1 = params["b1"].astype(jnp.float32)
    b2 = params["b2"].astype(jnp.float32)
    b3 = params["b3"].astype(jnp.float32)
    b4 = b4.astype(jnp.float32)

    # Constant index_map -> weights/biases stay VMEM-resident across the grid;
    # only the x / out blocks stream through the pipeline.
    resident = lambda a: pl.BlockSpec(a.shape, lambda i: (0,) * a.ndim)

    out = pl.pallas_call(
        _mlp_kernel,
        out_shape=jax.ShapeDtypeStruct((b_pad, out_pad), jnp.float32),
        grid=(n_steps,),
        in_specs=[
            pl.BlockSpec((tb, in_size), lambda i: (i, 0)),  # x tile over batch
            resident(w1), resident(b1),
            resident(w2), resident(b2),
            resident(w3), resident(b3),
            resident(w4), resident(b4),
        ],
        out_specs=pl.BlockSpec((tb, out_pad), lambda i: (i, 0)),
        compiler_params=pltpu.CompilerParams(
            dimension_semantics=("parallel",),      # megacore sharding on v7x
            vmem_limit_bytes=vmem_limit_bytes,      # explicit scoped-VMEM budget
        ),
    )(x_bf, w1, b1, w2, b2, w3, b3, w4, b4)

    return out[:B, :out_size].astype(x.dtype)


def init_mlp_params(key, input_size, output_size, hidden_size, init_w=0.003):
    """Deterministic init mirroring the PyTorch module:
    - hidden layers: default nn.Linear init, uniform(-1/sqrt(fan_in), 1/sqrt(fan_in))
    - final layer: uniform(-init_w, init_w) for both weight and bias."""
    keys = jax.random.split(key, 8)

    def linear_init(kw, kb, fan_in, fan_out, bound):
        w = jax.random.uniform(kw, (fan_in, fan_out), jnp.float32, -bound, bound)
        b = jax.random.uniform(kb, (1, fan_out), jnp.float32, -bound, bound)
        return w, b

    b1_bound = 1.0 / jnp.sqrt(input_size)
    bh_bound = 1.0 / jnp.sqrt(hidden_size)

    w1, b1 = linear_init(keys[0], keys[1], input_size, hidden_size, b1_bound)
    w2, b2 = linear_init(keys[2], keys[3], hidden_size, hidden_size, bh_bound)
    w3, b3 = linear_init(keys[4], keys[5], hidden_size, hidden_size, bh_bound)
    w4, b4 = linear_init(keys[6], keys[7], hidden_size, output_size, init_w)

    return {"w1": w1, "b1": b1, "w2": w2, "b2": b2,
            "w3": w3, "b3": b3, "w4": w4, "b4": b4}


def mlp_reference_f32(x, p):
    h = jnp.maximum(x @ p["w1"] + p["b1"], 0.0)
    h = jnp.maximum(h @ p["w2"] + p["b2"], 0.0)
    h = jnp.maximum(h @ p["w3"] + p["b3"], 0.0)
    return h @ p["w4"] + p["b4"]


def mlp_reference_mixed(x, p):
    """Same bf16-operand / f32-accumulate precision recipe as the kernel."""
    bf = jnp.bfloat16
    h = jnp.dot(x.astype(bf), p["w1"].astype(bf),
                preferred_element_type=jnp.float32) + p["b1"]
    h = jnp.maximum(h, 0.0).astype(bf)
    h = jnp.dot(h, p["w2"].astype(bf),
                preferred_element_type=jnp.float32) + p["b2"]
    h = jnp.maximum(h, 0.0).astype(bf)
    h = jnp.dot(h, p["w3"].astype(bf),
                preferred_element_type=jnp.float32) + p["b3"]
    h = jnp.maximum(h, 0.0).astype(bf)
    return jnp.dot(h, p["w4"].astype(bf),
                   preferred_element_type=jnp.float32) + p["b4"]


if __name__ == "__main__":
    key = jax.random.PRNGKey(0)
    k_x, k_p = jax.random.split(key)

    batch = 1000          # not a multiple of the tile -> exercises tail padding
    input_size = 16
    hidden_size = 32
    output_size = 4

    x = jax.random.normal(k_x, (batch, input_size), jnp.float32)
    params = init_mlp_params(k_p, input_size, output_size, hidden_size)

    out = mlp_forward(x, params, tb=256)
    out = jax.block_until_ready(out)
    assert out.shape == (batch, output_size)

    # Tight check vs a reference using the same mixed-precision recipe.
    ref_mixed = mlp_reference_mixed(x, params)
    assert jnp.allclose(out, ref_mixed, atol=1e-5, rtol=1e-2), \
        "mismatch vs mixed-precision reference"

    # Loose sanity check vs the pure-f32 module semantics.
    ref_f32 = mlp_reference_f32(x, params)
    assert jnp.allclose(out, ref_f32, atol=1e-2, rtol=1e-1), \
        "mismatch vs f32 reference"

    print("KERNEL_OK")
</pallas_src>

<mosaic_0001>
module attributes {stable_mosaic.version = 11 : i64} {
  func.func @_mlp_kernel(%arg0: i32, %arg1: memref<256x16xbf16, #tpu.memory_space<vmem>>, %arg2: memref<16x32xbf16, #tpu.memory_space<vmem>>, %arg3: memref<1x32xf32, #tpu.memory_space<vmem>>, %arg4: memref<32x32xbf16, #tpu.memory_space<vmem>>, %arg5: memref<1x32xf32, #tpu.memory_space<vmem>>, %arg6: memref<32x32xbf16, #tpu.memory_space<vmem>>, %arg7: memref<1x32xf32, #tpu.memory_space<vmem>>, %arg8: memref<32x128xbf16, #tpu.memory_space<vmem>>, %arg9: memref<1x128xf32, #tpu.memory_space<vmem>>, %arg10: memref<256x128xf32, #tpu.memory_space<vmem>>) attributes {dimension_semantics = [#tpu.dimension_semantics<parallel>], iteration_bounds = array<i64: 4>, scalar_prefetch = 0 : i64, scratch_operands = 0 : i64, tpu.core_type = #tpu.core_type<tc>, window_params = [{transform_indices = @transform_0, window_bounds = array<i64: 256, 16>}, {pipeline_mode = #tpu.pipeline_mode<synchronous>, transform_indices = @transform_1, window_bounds = array<i64: 16, 32>}, {pipeline_mode = #tpu.pipeline_mode<synchronous>, transform_indices = @transform_2, window_bounds = array<i64: 1, 32>}, {pipeline_mode = #tpu.pipeline_mode<synchronous>, transform_indices = @transform_3, window_bounds = array<i64: 32, 32>}, {pipeline_mode = #tpu.pipeline_mode<synchronous>, transform_indices = @transform_4, window_bounds = array<i64: 1, 32>}, {pipeline_mode = #tpu.pipeline_mode<synchronous>, transform_indices = @transform_5, window_bounds = array<i64: 32, 32>}, {pipeline_mode = #tpu.pipeline_mode<synchronous>, transform_indices = @transform_6, window_bounds = array<i64: 1, 32>}, {pipeline_mode = #tpu.pipeline_mode<synchronous>, transform_indices = @transform_7, window_bounds = array<i64: 32, 128>}, {pipeline_mode = #tpu.pipeline_mode<synchronous>, transform_indices = @transform_8, window_bounds = array<i64: 1, 128>}, {transform_indices = @transform_9, window_bounds = array<i64: 256, 128>}]} {
    %c0 = arith.constant 0 : index
    %c0_0 = arith.constant 0 : index
    %0 = vector.load %arg1[%c0, %c0_0] : memref<256x16xbf16, #tpu.memory_space<vmem>>, vector<256x16xbf16>
    %c0_1 = arith.constant 0 : index
    %c0_2 = arith.constant 0 : index
    %1 = vector.load %arg2[%c0_1, %c0_2] : memref<16x32xbf16, #tpu.memory_space<vmem>>, vector<16x32xbf16>
    %cst = arith.constant dense<0.000000e+00> : vector<256x32xf32>
    %2 = tpu.matmul %0, %1, %cst {dimension_numbers = #tpu.dot_dimension_numbers<[1], [0], [0], [1], [0, 0, 1, 1], [], []>} : vector<256x16xbf16>, vector<16x32xbf16>, vector<256x32xf32> -> vector<256x32xf32>
    %c0_3 = arith.constant 0 : index
    %c0_4 = arith.constant 0 : index
    %3 = vector.load %arg3[%c0_3, %c0_4] : memref<1x32xf32, #tpu.memory_space<vmem>>, vector<1x32xf32>
    %4 = vector.broadcast %3 : vector<1x32xf32> to vector<256x32xf32>
    %5 = arith.addf %2, %4 : vector<256x32xf32>
    %cst_5 = arith.constant 0.000000e+00 : f32
    %6 = vector.broadcast %cst_5 : f32 to vector<256x32xf32>
    %7 = arith.maximumf %5, %6 : vector<256x32xf32>
    %8 = arith.truncf %7 : vector<256x32xf32> to vector<256x32xbf16>
    %c0_6 = arith.constant 0 : index
    %c0_7 = arith.constant 0 : index
    %9 = vector.load %arg4[%c0_6, %c0_7] : memref<32x32xbf16, #tpu.memory_space<vmem>>, vector<32x32xbf16>
    %cst_8 = arith.constant dense<0.000000e+00> : vector<256x32xf32>
    %10 = tpu.matmul %8, %9, %cst_8 {dimension_numbers = #tpu.dot_dimension_numbers<[1], [0], [0], [1], [0, 0, 1, 1], [], []>} : vector<256x32xbf16>, vector<32x32xbf16>, vector<256x32xf32> -> vector<256x32xf32>
    %c0_9 = arith.constant 0 : index
    %c0_10 = arith.constant 0 : index
    %11 = vector.load %arg5[%c0_9, %c0_10] : memref<1x32xf32, #tpu.memory_space<vmem>>, vector<1x32xf32>
    %12 = vector.broadcast %11 : vector<1x32xf32> to vector<256x32xf32>
    %13 = arith.addf %10, %12 : vector<256x32xf32>
    %cst_11 = arith.constant 0.000000e+00 : f32
    %14 = vector.broadcast %cst_11 : f32 to vector<256x32xf32>
    %15 = arith.maximumf %13, %14 : vector<256x32xf32>
    %16 = arith.truncf %15 : vector<256x32xf32> to vector<256x32xbf16>
    %c0_12 = arith.constant 0 : index
    %c0_13 = arith.constant 0 : index
    %17 = vector.load %arg6[%c0_12, %c0_13] : memref<32x32xbf16, #tpu.memory_space<vmem>>, vector<32x32xbf16>
    %cst_14 = arith.constant dense<0.000000e+00> : vector<256x32xf32>
    %18 = tpu.matmul %16, %17, %cst_14 {dimension_numbers = #tpu.dot_dimension_numbers<[1], [0], [0], [1], [0, 0, 1, 1], [], []>} : vector<256x32xbf16>, vector<32x32xbf16>, vector<256x32xf32> -> vector<256x32xf32>
    %c0_15 = arith.constant 0 : index
    %c0_16 = arith.constant 0 : index
    %19 = vector.load %arg7[%c0_15, %c0_16] : memref<1x32xf32, #tpu.memory_space<vmem>>, vector<1x32xf32>
    %20 = vector.broadcast %19 : vector<1x32xf32> to vector<256x32xf32>
    %21 = arith.addf %18, %20 : vector<256x32xf32>
    %cst_17 = arith.constant 0.000000e+00 : f32
    %22 = vector.broadcast %cst_17 : f32 to vector<256x32xf32>
    %23 = arith.maximumf %21, %22 : vector<256x32xf32>
    %24 = arith.truncf %23 : vector<256x32xf32> to vector<256x32xbf16>
    %c0_18 = arith.constant 0 : index
    %c0_19 = arith.constant 0 : index
    %25 = vector.load %arg8[%c0_18, %c0_19] : memref<32x128xbf16, #tpu.memory_space<vmem>>, vector<32x128xbf16>
    %cst_20 = arith.constant dense<0.000000e+00> : vector<256x128xf32>
    %26 = tpu.matmul %24, %25, %cst_20 {dimension_numbers = #tpu.dot_dimension_numbers<[1], [0], [0], [1], [0, 0, 1, 1], [], []>} : vector<256x32xbf16>, vector<32x128xbf16>, vector<256x128xf32> -> vector<256x128xf32>
    %c0_21 = arith.constant 0 : index
    %c0_22 = arith.constant 0 : index
    %27 = vector.load %arg9[%c0_21, %c0_22] : memref<1x128xf32, #tpu.memory_space<vmem>>, vector<1x128xf32>
    %28 = vector.broadcast %27 : vector<1x128xf32> to vector<256x128xf32>
    %29 = arith.addf %26, %28 : vector<256x128xf32>
    %c0_23 = arith.constant 0 : index
    %c0_24 = arith.constant 0 : index
    %30 = vector.load %arg10[%c0_23, %c0_24] : memref<256x128xf32, #tpu.memory_space<vmem>>, vector<256x128xf32>
    tpu.vector_store %arg10[%c0_23, %c0_24], %29 {strides = array<i32>} : memref<256x128xf32, #tpu.memory_space<vmem>>, vector<256x128xf32>,
    return
  }
  func.func @transform_0(%arg0: i32) -> (i32, i32) {
    %c0_i32 = arith.constant 0 : i32
    %c0_i32_0 = arith.constant 0 : i32
    return %arg0, %c0_i32 : i32, i32
  }
  func.func @transform_1(%arg0: i32) -> (i32, i32) {
    %c0_i32 = arith.constant 0 : i32
    %c0_i32_0 = arith.constant 0 : i32
    %c0_i32_1 = arith.constant 0 : i32
    return %c0_i32, %c0_i32_0 : i32, i32
  }
  func.func @transform_2(%arg0: i32) -> (i32, i32) {
    %c0_i32 = arith.constant 0 : i32
    %c0_i32_0 = arith.constant 0 : i32
    %c0_i32_1 = arith.constant 0 : i32
    return %c0_i32, %c0_i32_0 : i32, i32
  }
  func.func @transform_3(%arg0: i32) -> (i32, i32) {
    %c0_i32 = arith.constant 0 : i32
    %c0_i32_0 = arith.constant 0 : i32
    %c0_i32_1 = arith.constant 0 : i32
    return %c0_i32, %c0_i32_0 : i32, i32
  }
  func.func @transform_4(%arg0: i32) -> (i32, i32) {
    %c0_i32 = arith.constant 0 : i32
    %c0_i32_0 = arith.constant 0 : i32
    %c0_i32_1 = arith.constant 0 : i32
    return %c0_i32, %c0_i32_0 : i32, i32
  }
  func.func @transform_5(%arg0: i32) -> (i32, i32) {
    %c0_i32 = arith.constant 0 : i32
    %c0_i32_0 = arith.constant 0 : i32
    %c0_i32_1 = arith.constant 0 : i32
    return %c0_i32, %c0_i32_0 : i32, i32
  }
  func.func @transform_6(%arg0: i32) -> (i32, i32) {
    %c0_i32 = arith.constant 0 : i32
    %c0_i32_0 = arith.constant 0 : i32
    %c0_i32_1 = arith.constant 0 : i32
    return %c0_i32, %c0_i32_0 : i32, i32
  }
  func.func @transform_7(%arg0: i32) -> (i32, i32) {
    %c0_i32 = arith.constant 0 : i32
    %c0_i32_0 = arith.constant 0 : i32
    %c0_i32_1 = arith.constant 0 : i32
    return %c0_i32, %c0_i32_0 : i32, i32
  }
  func.func @transform_8(%arg0: i32) -> (i32, i32) {
    %c0_i32 = arith.constant 0 : i32
    %c0_i32_0 = arith.constant 0 : i32
    %c0_i32_1 = arith.constant 0 : i32
    return %c0_i32, %c0_i32_0 : i32, i32
  }
  func.func @transform_9(%arg0: i32) -> (i32, i32) {
    %c0_i32 = arith.constant 0 : i32
    %c0_i32_0 = arith.constant 0 : i32
    return %arg0, %c0_i32 : i32, i32
  }
}

</mosaic_0001>

<llo_original>
// kernel: tpu_custom_call.1
$region0: #{tpu_custom_call.1}
  #allocation0 [shape = 'u32[]', space=smem, size = 0x4, offset = 0x4, fixed_abs, tag = 'smem constant byte address 0x4 - core index']
  #allocation1 [shape = 'u32[144,128]{1,0:T(1,128)}', space=vmem, size = 0x12000, scoped, tag = 'internal scratch']
  %s0 = inlined_call_operand.vmem [shape: bf16[1024,16], index: 0, kind: input, shape index: {}]
  %s1 = inlined_call_operand.vmem [shape: bf16[16,32], index: 1, kind: input, shape index: {}]
  %s2 = inlined_call_operand.vmem [shape: f32[1,32], index: 2, kind: input, shape index: {}]
  %s3 = inlined_call_operand.vmem [shape: bf16[32,32], index: 3, kind: input, shape index: {}]
  %s4 = inlined_call_operand.vmem [shape: f32[1,32], index: 4, kind: input, shape index: {}]
  %s5 = inlined_call_operand.vmem [shape: bf16[32,32], index: 5, kind: input, shape index: {}]
  %s6 = inlined_call_operand.vmem [shape: f32[1,32], index: 6, kind: input, shape index: {}]
  %s7 = inlined_call_operand.vmem [shape: bf16[32,128], index: 7, kind: input, shape index: {}]
  %s8 = inlined_call_operand.vmem [shape: f32[1,128], index: 8, kind: input, shape index: {}]
  %s9 = inlined_call_operand.hbm [shape: f32[1024,128], index: 9, kind: output, shape index: {}]
  %s10 = sld [smem:[#allocation0]]
  $region69: #{tpu_custom_call.1} parent=0
    _
  %s12 = ssub.s32 1, %s10
  %s13 = scalar_select 0, %s12, %s10
  $region1: #{tpu_custom_call.1} parent=0
    #allocation2 [shape = 'u8[262144]{0}', space=vmem, size = 0x40000, scoped, tag = 'output window, operand 0']
    #allocation3 [shape = 's32[2]{0}', space=sflag, size = 0x8, scoped, tag = 'scoped memory for tpu_custom_call.1']
    %14 = vsyncpa [#allocation3], 0
    %s15 = scalar_lea.sflag [#allocation3], 1
    %16 = vsyncpa %s15, 0
    loop: start=0, step=1, limit=6
    $region2: #{tpu_custom_call.1} parent=1 // loop_pre_header
      _
    $region3: #{tpu_custom_call.1} parent=1 // loop_header
      %s18 = sphi 0, %s22
      %p19 = scmp.ge.s32.totalorder %s18, 6
      %s28 = sphi 0, %s30
      %s31 = sphi 0, %s28
      %s32 = sphi 0, %s31
      %s48 = sphi 0, %s32
      %s52 = sphi 0, %s52
      %s54 = sphi 0, %s52
      %s55 = sphi 0, %s54
      %s69 = sphi 0, %s55
      %s73 = sphi 0, %s73
      %s75 = sphi 0, %s73
      %s76 = sphi 0, %s75
      %s90 = sphi 0, %s76
      %s94 = sphi 0, %s94
      %s96 = sphi 0, %s94
      %s97 = sphi 0, %s96
      %s111 = sphi 0, %s97
      %s115 = sphi 0, %s115
      %s117 = sphi 0, %s115
      %s118 = sphi 0, %s117
      %s132 = sphi 0, %s118
      %s136 = sphi 0, %s136
      %s138 = sphi 0, %s136
      %s139 = sphi 0, %s138
      %s153 = sphi 0, %s139
      %s157 = sphi 0, %s157
      %s159 = sphi 0, %s157
      %s160 = sphi 0, %s159
      %s174 = sphi 0, %s160
      %s178 = sphi 0, %s178
      %s180 = sphi 0, %s178
      %s181 = sphi 0, %s180
      %s195 = sphi 0, %s181
      %s199 = sphi 0, %s199
      %s201 = sphi 0, %s199
      %s202 = sphi 0, %s201
      %s216 = sphi 0, %s202
      %s222 = sphi 0, %s224
      %s225 = sphi 0, %s222
      %s226 = sphi 0, %s225
      %s242 = sphi 0, %s226
    $region4: #{tpu_custom_call.1} parent=1 // loop_header_branch
      %21 = sbr.rel (%p19) target = $region8
    $region5: #{tpu_custom_call.1} parent=1 // loop_body
      %s23 = ssub.s32 %s18, 1
      %s24 = ssub.s32 %s18, 2
      %s25 = sadd.s32 %s18, 1
      %s26 = ssub.s32 %s18, %s25
      %p27 = scmp.eq.s32.totalorder %s26, 0
      %s29 = sadd.s32 %s28, 1
      %s30 = scalar_select %p27, %s28, %s29
      %p33 = pneg %p27
      %p34 = scmp.eq.s32.totalorder %s18, 3
      %p35 = por %p33, %p34
      %p36 = scmp.ne.s32.totalorder %s28, %s31
      %p37 = scmp.eq.s32.totalorder %s18, 0
      %p38 = por %p36, %p37
      %p39 = scmp.ne.s32.totalorder %s28, %s31
      %p40 = scmp.eq.s32.totalorder %s23, 3
      %p41 = por %p39, %p40
      %p42 = scmp.ne.s32.totalorder %s31, %s32
      %p43 = scmp.eq.s32.totalorder %s23, 0
      %p44 = por %p42, %p43
      %p45 = scmp.ne.s32.totalorder %s31, %s32
      %p46 = scmp.eq.s32.totalorder %s24, 3
      %p47 = por %p45, %p46
      %p49 = scmp.ne.s32.totalorder %s32, %s48
      %p50 = scmp.eq.s32.totalorder %s24, 0
      %p51 = por %p49, %p50
      %s53 = sadd.s32 %s52, 1
      %p56 = scmp.eq.s32.totalorder %s18, 3
      %p57 = scmp.ne.s32.totalorder %s52, %s54
      %p58 = scmp.eq.s32.totalorder %s18, 0
      %p59 = por %p57, %p58
      %p60 = scmp.ne.s32.totalorder %s52, %s54
      %p61 = scmp.eq.s32.totalorder %s23, 3
      %p62 = por %p60, %p61
      %p63 = scmp.ne.s32.totalorder %s54, %s55
      %p64 = scmp.eq.s32.totalorder %s23, 0
      %p65 = por %p63, %p64
      %p66 = scmp.ne.s32.totalorder %s54, %s55
      %p67 = scmp.eq.s32.totalorder %s24, 3
      %p68 = por %p66, %p67
      %p70 = scmp.ne.s32.totalorder %s55, %s69
      %p71 = scmp.eq.s32.totalorder %s24, 0
      %p72 = por %p70, %p71
      %s74 = sadd.s32 %s73, 1
      %p77 = scmp.eq.s32.totalorder %s18, 3
      %p78 = scmp.ne.s32.totalorder %s73, %s75
      %p79 = scmp.eq.s32.totalorder %s18, 0
      %p80 = por %p78, %p79
      %p81 = scmp.ne.s32.totalorder %s73, %s75
      %p82 = scmp.eq.s32.totalorder %s23, 3
      %p83 = por %p81, %p82
      %p84 = scmp.ne.s32.totalorder %s75, %s76
      %p85 = scmp.eq.s32.totalorder %s23, 0
      %p86 = por %p84, %p85
      %p87 = scmp.ne.s32.totalorder %s75, %s76
      %p88 = scmp.eq.s32.totalorder %s24, 3
      %p89 = por %p87, %p88
      %p91 = scmp.ne.s32.totalorder %s76, %s90
      %p92 = scmp.eq.s32.totalorder %s24, 0
      %p93 = por %p91, %p92
      %s95 = sadd.s32 %s94, 1
      %p98 = scmp.eq.s32.totalorder %s18, 3
      %p99 = scmp.ne.s32.totalorder %s94, %s96
      %p100 = scmp.eq.s32.totalorder %s18, 0
      %p101 = por %p99, %p100
      %p102 = scmp.ne.s32.totalorder %s94, %s96
      %p103 = scmp.eq.s32.totalorder %s23, 3
      %p104 = por %p102, %p103
      %p105 = scmp.ne.s32.totalorder %s96, %s97
      %p106 = scmp.eq.s32.totalorder %s23, 0
      %p107 = por %p105, %p106
      %p108 = scmp.ne.s32.totalorder %s96, %s97
      %p109 = scmp.eq.s32.totalorder %s24, 3
      %p110 = por %p108, %p109
      %p112 = scmp.ne.s32.totalorder %s97, %s111
      %p113 = scmp.eq.s32.totalorder %s24, 0
      %p114 = por %p112, %p113
      %s116 = sadd.s32 %s115, 1
      %p119 = scmp.eq.s32.totalorder %s18, 3
      %p120 = scmp.ne.s32.totalorder %s115, %s117
      %p121 = scmp.eq.s32.totalorder %s18, 0
      %p122 = por %p120, %p121
      %p123 = scmp.ne.s32.totalorder %s115, %s117
      %p124 = scmp.eq.s32.totalorder %s23, 3
      %p125 = por %p123, %p124
      %p126 = scmp.ne.s32.totalorder %s117, %s118
      %p127 = scmp.eq.s32.totalorder %s23, 0
      %p128 = por %p126, %p127
      %p129 = scmp.ne.s32.totalorder %s117, %s118
      %p130 = scmp.eq.s32.totalorder %s24, 3
      %p131 = por %p129, %p130
      %p133 = scmp.ne.s32.totalorder %s118, %s132
      %p134 = scmp.eq.s32.totalorder %s24, 0
      %p135 = por %p133, %p134
      %s137 = sadd.s32 %s136, 1
      %p140 = scmp.eq.s32.totalorder %s18, 3
      %p141 = scmp.ne.s32.totalorder %s136, %s138
      %p142 = scmp.eq.s32.totalorder %s18, 0
      %p143 = por %p141, %p142
      %p144 = scmp.ne.s32.totalorder %s136, %s138
      %p145 = scmp.eq.s32.totalorder %s23, 3
      %p146 = por %p144, %p145
      %p147 = scmp.ne.s32.totalorder %s138, %s139
      %p148 = scmp.eq.s32.totalorder %s23, 0
      %p149 = por %p147, %p148
      %p150 = scmp.ne.s32.totalorder %s138, %s139
      %p151 = scmp.eq.s32.totalorder %s24, 3
      %p152 = por %p150, %p151
      %p154 = scmp.ne.s32.totalorder %s139, %s153
      %p155 = scmp.eq.s32.totalorder %s24, 0
      %p156 = por %p154, %p155
      %s158 = sadd.s32 %s157, 1
      %p161 = scmp.eq.s32.totalorder %s18, 3
      %p162 = scmp.ne.s32.totalorder %s157, %s159
      %p163 = scmp.eq.s32.totalorder %s18, 0
      %p164 = por %p162, %p163
      %p165 = scmp.ne.s32.totalorder %s157, %s159
      %p166 = scmp.eq.s32.totalorder %s23, 3
      %p167 = por %p165, %p166
      %p168 = scmp.ne.s32.totalorder %s159, %s160
      %p169 = scmp.eq.s32.totalorder %s23, 0
      %p170 = por %p168, %p169
      %p171 = scmp.ne.s32.totalorder %s159, %s160
      %p172 = scmp.eq.s32.totalorder %s24, 3
      %p173 = por %p171, %p172
      %p175 = scmp.ne.s32.totalorder %s160, %s174
      %p176 = scmp.eq.s32.totalorder %s24, 0
      %p177 = por %p175, %p176
      %s179 = sadd.s32 %s178, 1
      %p182 = scmp.eq.s32.totalorder %s18, 3
      %p183 = scmp.ne.s32.totalorder %s178, %s180
      %p184 = scmp.eq.s32.totalorder %s18, 0
      %p185 = por %p183, %p184
      %p186 = scmp.ne.s32.totalorder %s178, %s180
      %p187 = scmp.eq.s32.totalorder %s23, 3
      %p188 = por %p186, %p187
      %p189 = scmp.ne.s32.totalorder %s180, %s181
      %p190 = scmp.eq.s32.totalorder %s23, 0
      %p191 = por %p189, %p190
      %p192 = scmp.ne.s32.totalorder %s180, %s181
      %p193 = scmp.eq.s32.totalorder %s24, 3
      %p194 = por %p192, %p193
      %p196 = scmp.ne.s32.totalorder %s181, %s195
      %p197 = scmp.eq.s32.totalorder %s24, 0
      %p198 = por %p196, %p197
      %s200 = sadd.s32 %s199, 1
      %p203 = scmp.eq.s32.totalorder %s18, 3
      %p204 = scmp.ne.s32.totalorder %s199, %s201
      %p205 = scmp.eq.s32.totalorder %s18, 0
      %p206 = por %p204, %p205
      %p207 = scmp.ne.s32.totalorder %s199, %s201
      %p208 = scmp.eq.s32.totalorder %s23, 3
      %p209 = por %p207, %p208
      %p210 = scmp.ne.s32.totalorder %s201, %s202
      %p211 = scmp.eq.s32.totalorder %s23, 0
      %p212 = por %p210, %p211
      %p213 = scmp.ne.s32.totalorder %s201, %s202
      %p214 = scmp.eq.s32.totalorder %s24, 3
      %p215 = por %p213, %p214
      %p217 = scmp.ne.s32.totalorder %s202, %s216
      %p218 = scmp.eq.s32.totalorder %s24, 0
      %p219 = por %p217, %p218
      %s220 = ssub.s32 %s18, %s25
      %p221 = scmp.eq.s32.totalorder %s220, 0
      %s223 = sadd.s32 %s222, 1
      %s224 = scalar_select %p221, %s222, %s223
      %p227 = pneg %p221
      %p228 = scmp.eq.s32.totalorder %s18, 3
      %p229 = por %p227, %p228
      %p230 = scmp.ne.s32.totalorder %s222, %s225
      %p231 = scmp.eq.s32.totalorder %s18, 0
      %p232 = por %p230, %p231
      %p233 = scmp.ne.s32.totalorder %s222, %s225
      %p234 = scmp.eq.s32.totalorder %s23, 3
      %p235 = por %p233, %p234
      %p236 = scmp.ne.s32.totalorder %s225, %s226
      %p237 = scmp.eq.s32.totalorder %s23, 0
      %p238 = por %p236, %p237
      %p239 = scmp.ne.s32.totalorder %s225, %s226
      %p240 = scmp.eq.s32.totalorder %s24, 3
      %p241 = por %p239, %p240
      %p243 = scmp.ne.s32.totalorder %s226, %s242
      %p244 = scmp.eq.s32.totalorder %s24, 0
      %p245 = por %p243, %p244
      %p246 = scmp.le.s32.totalorder 1, %s18
      %p247 = scmp.lt.s32.totalorder %s18, 5
      %p248 = pnand %p246, %p247
      %p249 = pneg %p248
      // Predicated region
      $region9: #{tpu_custom_call.1} parent=5 // pred_check
        _
      $region10: #{tpu_custom_call.1} parent=5 // pred_check_branch
        %251 = sbr.rel (%p248) target = $region12
      $region11: #{tpu_custom_call.1} parent=5 // pred_region
        %s252 = ssub.s32 %s18, 1
        // Predicated region
        $region13: #{tpu_custom_call.1} parent=11 // pred_check
          %p253 = pneg %p65
        $region14: #{tpu_custom_call.1} parent=11 // pred_check_branch
          %255 = sbr.rel (%p253) target = $region16
        $region15: #{tpu_custom_call.1} parent=11 // pred_region
          _
        $region16: #{tpu_custom_call.1} parent=11 // pred_fallthru
          _
        // Predicated region
        $region17: #{tpu_custom_call.1} parent=11 // pred_check
          %p256 = pneg %p86
        $region18: #{tpu_custom_call.1} parent=11 // pred_check_branch
          %258 = sbr.rel (%p256) target = $region20
        $region19: #{tpu_custom_call.1} parent=11 // pred_region
          _
        $region20: #{tpu_custom_call.1} parent=11 // pred_fallthru
          _
        // Predicated region
        $region21: #{tpu_custom_call.1} parent=11 // pred_check
          %p259 = pneg %p107
        $region22: #{tpu_custom_call.1} parent=11 // pred_check_branch
          %261 = sbr.rel (%p259) target = $region24
        $region23: #{tpu_custom_call.1} parent=11 // pred_region
          _
        $region24: #{tpu_custom_call.1} parent=11 // pred_fallthru
          _
        // Predicated region
        $region25: #{tpu_custom_call.1} parent=11 // pred_check
          %p262 = pneg %p128
        $region26: #{tpu_custom_call.1} parent=11 // pred_check_branch
          %264 = sbr.rel (%p262) target = $region28
        $region27: #{tpu_custom_call.1} parent=11 // pred_region
          _
        $region28: #{tpu_custom_call.1} parent=11 // pred_fallthru
          _
        // Predicated region
        $region29: #{tpu_custom_call.1} parent=11 // pred_check
          %p265 = pneg %p149
        $region30: #{tpu_custom_call.1} parent=11 // pred_check_branch
          %267 = sbr.rel (%p265) target = $region32
        $region31: #{tpu_custom_call.1} parent=11 // pred_region
          _
        $region32: #{tpu_custom_call.1} parent=11 // pred_fallthru
          _
        // Predicated region
        $region33: #{tpu_custom_call.1} parent=11 // pred_check
          %p268 = pneg %p170
        $region34: #{tpu_custom_call.1} parent=11 // pred_check_branch
          %270 = sbr.rel (%p268) target = $region36
        $region35: #{tpu_custom_call.1} parent=11 // pred_region
          _
        $region36: #{tpu_custom_call.1} parent=11 // pred_fallthru
          _
        // Predicated region
        $region37: #{tpu_custom_call.1} parent=11 // pred_check
          %p271 = pneg %p191
        $region38: #{tpu_custom_call.1} parent=11 // pred_check_branch
          %273 = sbr.rel (%p271) target = $region40
        $region39: #{tpu_custom_call.1} parent=11 // pred_region
          _
        $region40: #{tpu_custom_call.1} parent=11 // pred_fallthru
          _
        // Predicated region
        $region41: #{tpu_custom_call.1} parent=11 // pred_check
          %p274 = pneg %p212
        $region42: #{tpu_custom_call.1} parent=11 // pred_check_branch
          %276 = sbr.rel (%p274) target = $region44
        $region43: #{tpu_custom_call.1} parent=11 // pred_region
          _
        $region44: #{tpu_custom_call.1} parent=11 // pred_fallthru
          _
      $region12: #{tpu_custom_call.1} parent=5 // pred_fallthru
        _
      %p277 = scmp.lt.s32.totalorder %s18, 4
      // Predicated region
      $region45: #{tpu_custom_call.1} parent=5 // pred_check
        %p278 = pneg %p277
      $region46: #{tpu_custom_call.1} parent=5 // pred_check_branch
        %280 = sbr.rel (%p278) target = $region48
      $region47: #{tpu_custom_call.1} parent=5 // pred_region
        // Predicated region
        $region49: #{tpu_custom_call.1} parent=47 // pred_check
          %p281 = pneg %p38
        $region50: #{tpu_custom_call.1} parent=47 // pred_check_branch
          %283 = sbr.rel (%p281) target = $region52
        $region51: #{tpu_custom_call.1} parent=47 // pred_region
          %s284 = smul.u32 32, %s18
          %p285 = scmp.lt.s32.totalorder %s284, 127
          %s286 = scalar_select %p285, %s284, 127
          %s287 = smul.addr %s286, 4
          %s288 = scalar_lea.vmem %s0, %s287
          %s289 = smul.u32 32, %s18
        $region52: #{tpu_custom_call.1} parent=47 // pred_fallthru
          _
      $region48: #{tpu_custom_call.1} parent=5 // pred_fallthru
        _
      %p290 = scmp.le.s32.totalorder 1, %s18
      %p291 = scmp.lt.s32.totalorder %s18, 5
      %p292 = pnand %p290, %p291
      %p293 = pneg %p292
      // Predicated region
      $region53: #{tpu_custom_call.1} parent=5 // pred_check
        _
      $region54: #{tpu_custom_call.1} parent=5 // pred_check_branch
        %295 = sbr.rel (%p292) target = $region56
      $region55: #{tpu_custom_call.1} parent=5 // pred_region
        %s296 = ssub.s32 %s18, 1
        %s297 = smul.u32 32, %s23
        %p298 = scmp.lt.s32.totalorder %s297, 127
        %s299 = scalar_select %p298, %s297, 127
        %s300 = smul.addr %s299, 4
        %s301 = scalar_lea.vmem %s0, %s300
        %p302 = pneg %p44
        %p303 = pneg %p41
        %p304 = pneg %p65
        %p305 = pneg %p62
        %p306 = pneg %p86
        %p307 = pneg %p83
        %p308 = pneg %p107
        %p309 = pneg %p104
        %p310 = pneg %p128
        %p311 = pneg %p125
        %p312 = pneg %p149
        %p313 = pneg %p146
        %p314 = pneg %p170
        %p315 = pneg %p167
        %p316 = pneg %p191
        %p317 = pneg %p188
        %p318 = pneg %p212
        %p319 = pneg %p209
        %p320 = pneg %p238
        %p321 = pneg %p235
        %s322 = sand.u32 %s225, 1
        %s323 = scalar_lea.sflag [#allocation3], %s322
        %s324 = sand.u32 %s225, 1
        %s325 = smul.addr %s324, 256
        %s326 = scalar_lea.vmem [#allocation2], %s325
        %s327 = smul.u32 32, %s23
        %p328 = scmp.lt.s32.totalorder %s327, 127
        %s329 = scalar_select %p328, %s327, 127
        %s330 = smul.addr %s329, 4
        %s331 = scalar_lea.vmem %s0, %s330
        %s332 = smul.u32 32, %s23
        %s333 = smul.u32 32, %s23
        %v335 = vld [vmem:[%s331] sm:$0xf]
        %v336 = vld [vmem:[%s331 + $0x4] sm:$0xf]
        %v337 = vld [vmem:[%s331 + $0x8] sm:$0xf]
        %v338 = vld [vmem:[%s331 + $0xc] sm:$0xf]
        %v339 = vld [vmem:[%s331 + $0x10] sm:$0xf]
        %v340 = vld [vmem:[%s331 + $0x14] sm:$0xf]
        %v341 = vld [vmem:[%s331 + $0x18] sm:$0xf]
        %v342 = vld [vmem:[%s331 + $0x1c] sm:$0xf]
        %v343 = vld [vmem:[%s331 + $0x20] sm:$0xf]
        %v344 = vld [vmem:[%s331 + $0x24] sm:$0xf]
        %v345 = vld [vmem:[%s331 + $0x28] sm:$0xf]
        %v346 = vld [vmem:[%s331 + $0x2c] sm:$0xf]
        %v347 = vld [vmem:[%s331 + $0x30] sm:$0xf]
        %v348 = vld [vmem:[%s331 + $0x34] sm:$0xf]
        %v349 = vld [vmem:[%s331 + $0x38] sm:$0xf]
        %v350 = vld [vmem:[%s331 + $0x3c] sm:$0xf]
        %v351 = vld [vmem:[%s331 + $0x40] sm:$0xf]
        %v352 = vld [vmem:[%s331 + $0x44] sm:$0xf]
        %v353 = vld [vmem:[%s331 + $0x48] sm:$0xf]
        %v354 = vld [vmem:[%s331 + $0x4c] sm:$0xf]
        %v355 = vld [vmem:[%s331 + $0x50] sm:$0xf]
        %v356 = vld [vmem:[%s331 + $0x54] sm:$0xf]
        %v357 = vld [vmem:[%s331 + $0x58] sm:$0xf]
        %v358 = vld [vmem:[%s331 + $0x5c] sm:$0xf]
        %v359 = vld [vmem:[%s331 + $0x60] sm:$0xf]
        %v360 = vld [vmem:[%s331 + $0x64] sm:$0xf]
        %v361 = vld [vmem:[%s331 + $0x68] sm:$0xf]
        %v362 = vld [vmem:[%s331 + $0x6c] sm:$0xf]
        %v363 = vld [vmem:[%s331 + $0x70] sm:$0xf]
        %v364 = vld [vmem:[%s331 + $0x74] sm:$0xf]
        %v365 = vld [vmem:[%s331 + $0x78] sm:$0xf]
        %v366 = vld [vmem:[%s331 + $0x7c] sm:$0xf]
        %v367 = vld [vmem:[%s1] sm:$0xf]
        %v368 = vld [vmem:[%s1 + $0x4] sm:$0xf]
        %v369 = vld [vmem:[%s2] sm:$0x1]
        %v371 = vlaneseq
        %v372 = vshrl.u32 %v371, 7
        %v373 = vsub.s32 0, %v372
        %v374 = vrot.slane %v369, %v373
        %v408 = vunpack.c.l.b16 %v335
        %v409 = vunpack.c.l.b16 %v336
        %v410 = vunpack.c.l.b16 %v337
        %v411 = vunpack.c.l.b16 %v338
        %v412 = vunpack.c.l.b16 %v339
        %v413 = vunpack.c.l.b16 %v340
        %v414 = vunpack.c.l.b16 %v341
        %v415 = vunpack.c.l.b16 %v342
        %v416 = vunpack.c.l.b16 %v343
        %v417 = vunpack.c.l.b16 %v344
        %v418 = vunpack.c.l.b16 %v345
        %v419 = vunpack.c.l.b16 %v346
        %v420 = vunpack.c.l.b16 %v347
        %v421 = vunpack.c.l.b16 %v348
        %v422 = vunpack.c.l.b16 %v349
        %v423 = vunpack.c.l.b16 %v350
        %v424 = vunpack.c.l.b16 %v351
        %v425 = vunpack.c.l.b16 %v352
        %v426 = vunpack.c.l.b16 %v353
        %v427 = vunpack.c.l.b16 %v354
        %v428 = vunpack.c.l.b16 %v355
        %v429 = vunpack.c.l.b16 %v356
        %v430 = vunpack.c.l.b16 %v357
        %v431 = vunpack.c.l.b16 %v358
        %v432 = vunpack.c.l.b16 %v359
        %v433 = vunpack.c.l.b16 %v360
        %v434 = vunpack.c.l.b16 %v361
        %v435 = vunpack.c.l.b16 %v362
        %v436 = vunpack.c.l.b16 %v363
        %v437 = vunpack.c.l.b16 %v364
        %v438 = vunpack.c.l.b16 %v365
        %v439 = vunpack.c.l.b16 %v366
        %v440 = vpack.c.b16 %v409, %v408
        %v441 = vpack.c.b16 %v411, %v410
        %v442 = vpack.c.b16 %v413, %v412
        %v443 = vpack.c.b16 %v415, %v414
        %v444 = vpack.c.b16 %v417, %v416
        %v445 = vpack.c.b16 %v419, %v418
        %v446 = vpack.c.b16 %v421, %v420
        %v447 = vpack.c.b16 %v423, %v422
        %v448 = vpack.c.b16 %v425, %v424
        %v449 = vpack.c.b16 %v427, %v426
        %v450 = vpack.c.b16 %v429, %v428
        %v451 = vpack.c.b16 %v431, %v430
        %v452 = vpack.c.b16 %v433, %v432
        %v453 = vpack.c.b16 %v435, %v434
        %v454 = vpack.c.b16 %v437, %v436
        %v455 = vpack.c.b16 %v439, %v438
        %v458 = vunpack.c.l.b16 %v367
        %v459 = vunpack.c.l.b16 %v368
        %v460 = vpack.c.b16 %v459, %v458
        %vm462 = vcmask 130048
        %v464 = vsel %vm462, %v440, 0
        %v467 = vsel %vm462, %v441, 0
        %v470 = vsel %vm462, %v442, 0
        %v473 = vsel %vm462, %v443, 0
        %v476 = vsel %vm462, %v444, 0
        %v479 = vsel %vm462, %v445, 0
        %v482 = vsel %vm462, %v446, 0
        %v485 = vsel %vm462, %v447, 0
        %v488 = vsel %vm462, %v448, 0
        %v491 = vsel %vm462, %v449, 0
        %v494 = vsel %vm462, %v450, 0
        %v497 = vsel %vm462, %v451, 0
        %v500 = vsel %vm462, %v452, 0
        %v503 = vsel %vm462, %v453, 0
        %v506 = vsel %vm462, %v454, 0
        %v509 = vsel %vm462, %v455, 0
        %511 = vmatprep.subr.bf16.mxu0 0
        %512 = vmatpush1.bf16.msra.mxu0 %v460
        %513 = vmatprep.subr.bf16.mxu0 0
        %514 = vmatpush1.bf16.msra.mxu0 0
        %515 = vmatprep.subr.bf16.mxu0 0
        %516 = vmatpush1.bf16.msra.mxu0 0
        %517 = vmatprep.subr.bf16.mxu0 0
        %518 = vmatpush1.bf16.msra.mxu0 0
        %519 = vmatprep.subr.bf16.mxu0 0
        %520 = vmatpush1.bf16.msra.mxu0 0
        %521 = vmatprep.subr.bf16.mxu0 0
        %522 = vmatpush1.bf16.msra.mxu0 0
        %523 = vmatprep.subr.bf16.mxu0 0
        %524 = vmatpush1.bf16.msra.mxu0 0
        %525 = vmatprep.subr.bf16.mxu0 0
        %526 = vmatpush1.bf16.msra.mxu0 0
        %527 = vmatprep.subr.bf16.mxu0 0
        %528 = vmatpush1.bf16.msra.mxu0 0
        %529 = vmatprep.subr.bf16.mxu0 0
        %530 = vmatpush1.bf16.msra.mxu0 0
        %531 = vmatprep.subr.bf16.mxu0 0
        %532 = vmatpush1.bf16.msra.mxu0 0
        %533 = vmatprep.subr.bf16.mxu0 0
        %534 = vmatpush1.bf16.msra.mxu0 0
        %535 = vmatprep.subr.bf16.mxu0 0
        %536 = vmatpush1.bf16.msra.mxu0 0
        %537 = vmatprep.subr.bf16.mxu0 0
        %538 = vmatpush1.bf16.msra.mxu0 0
        %539 = vmatprep.subr.bf16.mxu0 0
        %540 = vmatpush1.bf16.msra.mxu0 0
        %541 = vmatprep.subr.bf16.mxu0 0
        %542 = vmatpush1.bf16.msra.mxu0 0
        %543 = vmatprep.mubr.bf16.mxu0 0
        %544 = vmatmul.mubr.bf16.gmra.mrb[0].mxu0 %v464
        %v545 = vpop.f32.mrb[0].mxu0
        %v546 = vadd.f32 %v374, %v545
        %v547 = vpop.f32.mrb[0].mxu0
        %v548 = vpop.f32.mrb[0].mxu0
        %v549 = vadd.f32 %v374, %v548
        %v550 = vpop.f32.mrb[0].mxu0
        %551 = vmatprep.mubr.bf16.mxu0 0
        %552 = vmatmul.mubr.bf16.gmra.mrb[0].mxu0 %v467
        %v553 = vpop.f32.mrb[0].mxu0
        %v554 = vadd.f32 %v374, %v553
        %v555 = vpop.f32.mrb[0].mxu0
        %v556 = vpop.f32.mrb[0].mxu0
        %v557 = vadd.f32 %v374, %v556
        %v558 = vpop.f32.mrb[0].mxu0
        %559 = vmatprep.mubr.bf16.mxu0 0
        %560 = vmatmul.mubr.bf16.gmra.mrb[0].mxu0 %v470
        %v561 = vpop.f32.mrb[0].mxu0
        %v562 = vadd.f32 %v374, %v561
        %v563 = vpop.f32.mrb[0].mxu0
        %v564 = vpop.f32.mrb[0].mxu0
        %v565 = vadd.f32 %v374, %v564
        %v566 = vpop.f32.mrb[0].mxu0
        %567 = vmatprep.mubr.bf16.mxu0 0
        %568 = vmatmul.mubr.bf16.gmra.mrb[0].mxu0 %v473
        %v569 = vpop.f32.mrb[0].mxu0
        %v570 = vadd.f32 %v374, %v569
        %v571 = vpop.f32.mrb[0].mxu0
        %v572 = vpop.f32.mrb[0].mxu0
        %v573 = vadd.f32 %v374, %v572
        %v574 = vpop.f32.mrb[0].mxu0
        %575 = vmatprep.mubr.bf16.mxu0 0
        %576 = vmatmul.mubr.bf16.gmra.mrb[0].mxu0 %v476
        %v577 = vpop.f32.mrb[0].mxu0
        %v578 = vadd.f32 %v374, %v577
        %v579 = vpop.f32.mrb[0].mxu0
        %v580 = vpop.f32.mrb[0].mxu0
        %v581 = vadd.f32 %v374, %v580
        %v582 = vpop.f32.mrb[0].mxu0
        %583 = vmatprep.mubr.bf16.mxu0 0
        %584 = vmatmul.mubr.bf16.gmra.mrb[0].mxu0 %v479
        %v585 = vpop.f32.mrb[0].mxu0
        %v586 = vadd.f32 %v374, %v585
        %v587 = vpop.f32.mrb[0].mxu0
        %v588 = vpop.f32.mrb[0].mxu0
        %v589 = vadd.f32 %v374, %v588
        %v590 = vpop.f32.mrb[0].mxu0
        %591 = vmatprep.mubr.bf16.mxu0 0
        %592 = vmatmul.mubr.bf16.gmra.mrb[0].mxu0 %v482
        %v593 = vpop.f32.mrb[0].mxu0
        %v594 = vadd.f32 %v374, %v593
        %v595 = vpop.f32.mrb[0].mxu0
        %v596 = vpop.f32.mrb[0].mxu0
        %v597 = vadd.f32 %v374, %v596
        %v598 = vpop.f32.mrb[0].mxu0
        %599 = vmatprep.mubr.bf16.mxu0 0
        %600 = vmatmul.mubr.bf16.gmra.mrb[0].mxu0 %v485
        %v601 = vpop.f32.mrb[0].mxu0
        %v602 = vadd.f32 %v374, %v601
        %v603 = vpop.f32.mrb[0].mxu0
        %v604 = vpop.f32.mrb[0].mxu0
        %v605 = vadd.f32 %v374, %v604
        %v606 = vpop.f32.mrb[0].mxu0
        %607 = vmatprep.mubr.bf16.mxu0 0
        %608 = vmatmul.mubr.bf16.gmra.mrb[0].mxu0 %v488
        %v609 = vpop.f32.mrb[0].mxu0
        %v610 = vadd.f32 %v374, %v609
        %v611 = vpop.f32.mrb[0].mxu0
        %v612 = vpop.f32.mrb[0].mxu0
        %v613 = vadd.f32 %v374, %v612
        %v614 = vpop.f32.mrb[0].mxu0
        %615 = vmatprep.mubr.bf16.mxu0 0
        %616 = vmatmul.mubr.bf16.gmra.mrb[0].mxu0 %v491
        %v617 = vpop.f32.mrb[0].mxu0
        %v618 = vadd.f32 %v374, %v617
        %v619 = vpop.f32.mrb[0].mxu0
        %v620 = vpop.f32.mrb[0].mxu0
        %v621 = vadd.f32 %v374, %v620
        %v622 = vpop.f32.mrb[0].mxu0
        %623 = vmatprep.mubr.bf16.mxu0 0
        %624 = vmatmul.mubr.bf16.gmra.mrb[0].mxu0 %v494
        %v625 = vpop.f32.mrb[0].mxu0
        %v626 = vadd.f32 %v374, %v625
        %v627 = vpop.f32.mrb[0].mxu0
        %v628 = vpop.f32.mrb[0].mxu0
        %v629 = vadd.f32 %v374, %v628
        %v630 = vpop.f32.mrb[0].mxu0
        %631 = vmatprep.mubr.bf16.mxu0 0
        %632 = vmatmul.mubr.bf16.gmra.mrb[0].mxu0 %v497
        %v633 = vpop.f32.mrb[0].mxu0
        %v634 = vadd.f32 %v374, %v633
        %v635 = vpop.f32.mrb[0].mxu0
        %v636 = vpop.f32.mrb[0].mxu0
        %v637 = vadd.f32 %v374, %v636
        %v638 = vpop.f32.mrb[0].mxu0
        %639 = vmatprep.mubr.bf16.mxu0 0
        %640 = vmatmul.mubr.bf16.gmra.mrb[0].mxu0 %v500
        %v641 = vpop.f32.mrb[0].mxu0
        %v642 = vadd.f32 %v374, %v641
        %v643 = vpop.f32.mrb[0].mxu0
        %v644 = vpop.f32.mrb[0].mxu0
        %v645 = vadd.f32 %v374, %v644
        %v646 = vpop.f32.mrb[0].mxu0
        %647 = vmatprep.mubr.bf16.mxu0 0
        %648 = vmatmul.mubr.bf16.gmra.mrb[0].mxu0 %v503
        %v649 = vpop.f32.mrb[0].mxu0
        %v650 = vadd.f32 %v374, %v649
        %v651 = vpop.f32.mrb[0].mxu0
        %v652 = vpop.f32.mrb[0].mxu0
        %v653 = vadd.f32 %v374, %v652
        %v654 = vpop.f32.mrb[0].mxu0
        %655 = vmatprep.mubr.bf16.mxu0 0
        %656 = vmatmul.mubr.bf16.gmra.mrb[0].mxu0 %v506
        %v657 = vpop.f32.mrb[0].mxu0
        %v658 = vadd.f32 %v374, %v657
        %v659 = vpop.f32.mrb[0].mxu0
        %v660 = vpop.f32.mrb[0].mxu0
        %v661 = vadd.f32 %v374, %v660
        %v662 = vpop.f32.mrb[0].mxu0
        %663 = vmatprep.mubr.bf16.mxu0 0
        %664 = vmatmul.mubr.bf16.gmra.mrb[0].mxu0 %v509
        %v665 = vpop.f32.mrb[0].mxu0
        %v666 = vadd.f32 %v374, %v665
        %v667 = vpop.f32.mrb[0].mxu0
        %v668 = vpop.f32.mrb[0].mxu0
        %v669 = vadd.f32 %v374, %v668
        %v670 = vpop.f32.mrb[0].mxu0
        %671 = vdwg.mxu0
        %v672 = vmax.f32 %v546, 0.0
        %v673 = vmax.f32 %v549, 0.0
        %v674 = vmax.f32 %v554, 0.0
        %v675 = vmax.f32 %v557, 0.0
        %v676 = vmax.f32 %v562, 0.0
        %v677 = vmax.f32 %v565, 0.0
        %v678 = vmax.f32 %v570, 0.0
        %v679 = vmax.f32 %v573, 0.0
        %v680 = vmax.f32 %v578, 0.0
        %v681 = vmax.f32 %v581, 0.0
        %v682 = vmax.f32 %v586, 0.0
        %v683 = vmax.f32 %v589, 0.0
        %v684 = vmax.f32 %v594, 0.0
        %v685 = vmax.f32 %v597, 0.0
        %v686 = vmax.f32 %v602, 0.0
        %v687 = vmax.f32 %v605, 0.0
        %v688 = vmax.f32 %v610, 0.0
        %v689 = vmax.f32 %v613, 0.0
        %v690 = vmax.f32 %v618, 0.0
        %v691 = vmax.f32 %v621, 0.0
        %v692 = vmax.f32 %v626, 0.0
        %v693 = vmax.f32 %v629, 0.0
        %v694 = vmax.f32 %v634, 0.0
        %v695 = vmax.f32 %v637, 0.0
        %v696 = vmax.f32 %v642, 0.0
        %v697 = vmax.f32 %v645, 0.0
        %v698 = vmax.f32 %v650, 0.0
        %v699 = vmax.f32 %v653, 0.0
        %v700 = vmax.f32 %v658, 0.0
        %v701 = vmax.f32 %v661, 0.0
        %v702 = vmax.f32 %v666, 0.0
        %v703 = vmax.f32 %v669, 0.0
        %v704 = vpack.c.bf16 %v673, %v672
        %v705 = vpack.c.bf16 %v675, %v674
        %v706 = vpack.c.bf16 %v677, %v676
        %v707 = vpack.c.bf16 %v679, %v678
        %v708 = vpack.c.bf16 %v681, %v680
        %v709 = vpack.c.bf16 %v683, %v682
        %v710 = vpack.c.bf16 %v685, %v684
        %v711 = vpack.c.bf16 %v687, %v686
        %v712 = vpack.c.bf16 %v689, %v688
        %v713 = vpack.c.bf16 %v691, %v690
        %v714 = vpack.c.bf16 %v693, %v692
        %v715 = vpack.c.bf16 %v695, %v694
        %v716 = vpack.c.bf16 %v697, %v696
        %v717 = vpack.c.bf16 %v699, %v698
        %v718 = vpack.c.bf16 %v701, %v700
        %v719 = vpack.c.bf16 %v703, %v702
        %v720 = vld [vmem:[%s3] sm:$0xf]
        %v721 = vld [vmem:[%s3 + $0x4] sm:$0xf]
        %v722 = vld [vmem:[%s3 + $0x8] sm:$0xf]
        %v723 = vld [vmem:[%s3 + $0xc] sm:$0xf]
        %v724 = vld [vmem:[%s4] sm:$0x1]
        %v726 = vlaneseq
        %v727 = vshrl.u32 %v726, 7
        %v728 = vsub.s32 0, %v727
        %v729 = vrot.slane %v724, %v728
        %v735 = vunpack.c.l.b16 %v720
        %v736 = vunpack.c.l.b16 %v721
        %v737 = vunpack.c.l.b16 %v722
        %v738 = vunpack.c.l.b16 %v723
        %v739 = vpack.c.b16 %v736, %v735
        %v740 = vpack.c.b16 %v738, %v737
        %vm743 = vcmask 261120
        %v745 = vsel %vm743, %v704, 0
        %v748 = vsel %vm743, %v705, 0
        %v751 = vsel %vm743, %v706, 0
        %v754 = vsel %vm743, %v707, 0
        %v757 = vsel %vm743, %v708, 0
        %v760 = vsel %vm743, %v709, 0
        %v763 = vsel %vm743, %v710, 0
        %v766 = vsel %vm743, %v711, 0
        %v769 = vsel %vm743, %v712, 0
        %v772 = vsel %vm743, %v713, 0
        %v775 = vsel %vm743, %v714, 0
        %v778 = vsel %vm743, %v715, 0
        %v781 = vsel %vm743, %v716, 0
        %v784 = vsel %vm743, %v717, 0
        %v787 = vsel %vm743, %v718, 0
        %v790 = vsel %vm743, %v719, 0
        %792 = vmatprep.subr.bf16.mxu0 0
        %793 = vmatpush1.bf16.msra.mxu0 %v739
        %794 = vmatprep.subr.bf16.mxu0 0
        %795 = vmatpush1.bf16.msra.mxu0 %v740
        %796 = vmatprep.subr.bf16.mxu0 0
        %797 = vmatpush1.bf16.msra.mxu0 0
        %798 = vmatprep.subr.bf16.mxu0 0
        %799 = vmatpush1.bf16.msra.mxu0 0
        %800 = vmatprep.subr.bf16.mxu0 0
        %801 = vmatpush1.bf16.msra.mxu0 0
        %802 = vmatprep.subr.bf16.mxu0 0
        %803 = vmatpush1.bf16.msra.mxu0 0
        %804 = vmatprep.subr.bf16.mxu0 0
        %805 = vmatpush1.bf16.msra.mxu0 0
        %806 = vmatprep.subr.bf16.mxu0 0
        %807 = vmatpush1.bf16.msra.mxu0 0
        %808 = vmatprep.subr.bf16.mxu0 0
        %809 = vmatpush1.bf16.msra.mxu0 0
        %810 = vmatprep.subr.bf16.mxu0 0
        %811 = vmatpush1.bf16.msra.mxu0 0
        %812 = vmatprep.subr.bf16.mxu0 0
        %813 = vmatpush1.bf16.msra.mxu0 0
        %814 = vmatprep.subr.bf16.mxu0 0
        %815 = vmatpush1.bf16.msra.mxu0 0
        %816 = vmatprep.subr.bf16.mxu0 0
        %817 = vmatpush1.bf16.msra.mxu0 0
        %818 = vmatprep.subr.bf16.mxu0 0
        %819 = vmatpush1.bf16.msra.mxu0 0
        %820 = vmatprep.subr.bf16.mxu0 0
        %821 = vmatpush1.bf16.msra.mxu0 0
        %822 = vmatprep.subr.bf16.mxu0 0
        %823 = vmatpush1.bf16.msra.mxu0 0
        %824 = vmatprep.mubr.bf16.mxu0 0
        %825 = vmatmul.mubr.bf16.gmra.mrb[0].mxu0 %v745
        %v826 = vpop.f32.mrb[0].mxu0
        %v827 = vadd.f32 %v729, %v826
        %v828 = vpop.f32.mrb[0].mxu0
        %v829 = vpop.f32.mrb[0].mxu0
        %v830 = vadd.f32 %v729, %v829
        %v831 = vpop.f32.mrb[0].mxu0
        %832 = vmatprep.mubr.bf16.mxu0 0
        %833 = vmatmul.mubr.bf16.gmra.mrb[0].mxu0 %v748
        %v834 = vpop.f32.mrb[0].mxu0
        %v835 = vadd.f32 %v729, %v834
        %v836 = vpop.f32.mrb[0].mxu0
        %v837 = vpop.f32.mrb[0].mxu0
        %v838 = vadd.f32 %v729, %v837
        %v839 = vpop.f32.mrb[0].mxu0
        %840 = vmatprep.mubr.bf16.mxu0 0
        %841 = vmatmul.mubr.bf16.gmra.mrb[0].mxu0 %v751
        %v842 = vpop.f32.mrb[0].mxu0
        %v843 = vadd.f32 %v729, %v842
        %v844 = vpop.f32.mrb[0].mxu0
        %v845 = vpop.f32.mrb[0].mxu0
        %v846 = vadd.f32 %v729, %v845
        %v847 = vpop.f32.mrb[0].mxu0
        %848 = vmatprep.mubr.bf16.mxu0 0
        %849 = vmatmul.mubr.bf16.gmra.mrb[0].mxu0 %v754
        %v850 = vpop.f32.mrb[0].mxu0
        %v851 = vadd.f32 %v729, %v850
        %v852 = vpop.f32.mrb[0].mxu0
        %v853 = vpop.f32.mrb[0].mxu0
        %v854 = vadd.f32 %v729, %v853
        %v855 = vpop.f32.mrb[0].mxu0
        %856 = vmatprep.mubr.bf16.mxu0 0
        %857 = vmatmul.mubr.bf16.gmra.mrb[0].mxu0 %v757
        %v858 = vpop.f32.mrb[0].mxu0
        %v859 = vadd.f32 %v729, %v858
        %v860 = vpop.f32.mrb[0].mxu0
        %v861 = vpop.f32.mrb[0].mxu0
        %v862 = vadd.f32 %v729, %v861
        %v863 = vpop.f32.mrb[0].mxu0
        %864 = vmatprep.mubr.bf16.mxu0 0
        %865 = vmatmul.mubr.bf16.gmra.mrb[0].mxu0 %v760
        %v866 = vpop.f32.mrb[0].mxu0
        %v867 = vadd.f32 %v729, %v866
        %v868 = vpop.f32.mrb[0].mxu0
        %v869 = vpop.f32.mrb[0].mxu0
        %v870 = vadd.f32 %v729, %v869
        %v871 = vpop.f32.mrb[0].mxu0
        %872 = vmatprep.mubr.bf16.mxu0 0
        %873 = vmatmul.mubr.bf16.gmra.mrb[0].mxu0 %v763
        %v874 = vpop.f32.mrb[0].mxu0
        %v875 = vadd.f32 %v729, %v874
        %v876 = vpop.f32.mrb[0].mxu0
        %v877 = vpop.f32.mrb[0].mxu0
        %v878 = vadd.f32 %v729, %v877
        %v879 = vpop.f32.mrb[0].mxu0
        %880 = vmatprep.mubr.bf16.mxu0 0
        %881 = vmatmul.mubr.bf16.gmra.mrb[0].mxu0 %v766
        %v882 = vpop.f32.mrb[0].mxu0
        %v883 = vadd.f32 %v729, %v882
        %v884 = vpop.f32.mrb[0].mxu0
        %v885 = vpop.f32.mrb[0].mxu0
        %v886 = vadd.f32 %v729, %v885
        %v887 = vpop.f32.mrb[0].mxu0
        %888 = vmatprep.mubr.bf16.mxu0 0
        %889 = vmatmul.mubr.bf16.gmra.mrb[0].mxu0 %v769
        %v890 = vpop.f32.mrb[0].mxu0
        %v891 = vadd.f32 %v729, %v890
        %v892 = vpop.f32.mrb[0].mxu0
        %v893 = vpop.f32.mrb[0].mxu0
        %v894 = vadd.f32 %v729, %v893
        %v895 = vpop.f32.mrb[0].mxu0
        %896 = vmatprep.mubr.bf16.mxu0 0
        %897 = vmatmul.mubr.bf16.gmra.mrb[0].mxu0 %v772
        %v898 = vpop.f32.mrb[0].mxu0
        %v899 = vadd.f32 %v729, %v898
        %v900 = vpop.f32.mrb[0].mxu0
        %v901 = vpop.f32.mrb[0].mxu0
        %v902 = vadd.f32 %v729, %v901
        %v903 = vpop.f32.mrb[0].mxu0
        %904 = vmatprep.mubr.bf16.mxu0 0
        %905 = vmatmul.mubr.bf16.gmra.mrb[0].mxu0 %v775
        %v906 = vpop.f32.mrb[0].mxu0
        %v907 = vadd.f32 %v729, %v906
        %v908 = vpop.f32.mrb[0].mxu0
        %v909 = vpop.f32.mrb[0].mxu0
        %v910 = vadd.f32 %v729, %v909
        %v911 = vpop.f32.mrb[0].mxu0
        %912 = vmatprep.mubr.bf16.mxu0 0
        %913 = vmatmul.mubr.bf16.gmra.mrb[0].mxu0 %v778
        %v914 = vpop.f32.mrb[0].mxu0
        %v915 = vadd.f32 %v729, %v914
        %v916 = vpop.f32.mrb[0].mxu0
        %v917 = vpop.f32.mrb[0].mxu0
        %v918 = vadd.f32 %v729, %v917
        %v919 = vpop.f32.mrb[0].mxu0
        %920 = vmatprep.mubr.bf16.mxu0 0
        %921 = vmatmul.mubr.bf16.gmra.mrb[0].mxu0 %v781
        %v922 = vpop.f32.mrb[0].mxu0
        %v923 = vadd.f32 %v729, %v922
        %v924 = vpop.f32.mrb[0].mxu0
        %v925 = vpop.f32.mrb[0].mxu0
        %v926 = vadd.f32 %v729, %v925
        %v927 = vpop.f32.mrb[0].mxu0
        %928 = vmatprep.mubr.bf16.mxu0 0
        %929 = vmatmul.mubr.bf16.gmra.mrb[0].mxu0 %v784
        %v930 = vpop.f32.mrb[0].mxu0
        %v931 = vadd.f32 %v729, %v930
        %v932 = vpop.f32.mrb[0].mxu0
        %v933 = vpop.f32.mrb[0].mxu0
        %v934 = vadd.f32 %v729, %v933
        %v935 = vpop.f32.mrb[0].mxu0
        %936 = vmatprep.mubr.bf16.mxu0 0
        %937 = vmatmul.mubr.bf16.gmra.mrb[0].mxu0 %v787
        %v938 = vpop.f32.mrb[0].mxu0
        %v939 = vadd.f32 %v729, %v938
        %v940 = vpop.f32.mrb[0].mxu0
        %v941 = vpop.f32.mrb[0].mxu0
        %v942 = vadd.f32 %v729, %v941
        %v943 = vpop.f32.mrb[0].mxu0
        %944 = vmatprep.mubr.bf16.mxu0 0
        %945 = vmatmul.mubr.bf16.gmra.mrb[0].mxu0 %v790
        %v946 = vpop.f32.mrb[0].mxu0
        %v947 = vadd.f32 %v729, %v946
        %v948 = vpop.f32.mrb[0].mxu0
        %v949 = vpop.f32.mrb[0].mxu0
        %v950 = vadd.f32 %v729, %v949
        %v951 = vpop.f32.mrb[0].mxu0
        %952 = vdwg.mxu0
        %v953 = vmax.f32 %v827, 0.0
        %v954 = vmax.f32 %v830, 0.0
        %v955 = vmax.f32 %v835, 0.0
        %v956 = vmax.f32 %v838, 0.0
        %v957 = vmax.f32 %v843, 0.0
        %v958 = vmax.f32 %v846, 0.0
        %v959 = vmax.f32 %v851, 0.0
        %v960 = vmax.f32 %v854, 0.0
        %v961 = vmax.f32 %v859, 0.0
        %v962 = vmax.f32 %v862, 0.0
        %v963 = vmax.f32 %v867, 0.0
        %v964 = vmax.f32 %v870, 0.0
        %v965 = vmax.f32 %v875, 0.0
        %v966 = vmax.f32 %v878, 0.0
        %v967 = vmax.f32 %v883, 0.0
        %v968 = vmax.f32 %v886, 0.0
        %v969 = vmax.f32 %v891, 0.0
        %v970 = vmax.f32 %v894, 0.0
        %v971 = vmax.f32 %v899, 0.0
        %v972 = vmax.f32 %v902, 0.0
        %v973 = vmax.f32 %v907, 0.0
        %v974 = vmax.f32 %v910, 0.0
        %v975 = vmax.f32 %v915, 0.0
        %v976 = vmax.f32 %v918, 0.0
        %v977 = vmax.f32 %v923, 0.0
        %v978 = vmax.f32 %v926, 0.0
        %v979 = vmax.f32 %v931, 0.0
        %v980 = vmax.f32 %v934, 0.0
        %v981 = vmax.f32 %v939, 0.0
        %v982 = vmax.f32 %v942, 0.0
        %v983 = vmax.f32 %v947, 0.0
        %v984 = vmax.f32 %v950, 0.0
        %v985 = vpack.c.bf16 %v954, %v953
        %v986 = vpack.c.bf16 %v956, %v955
        %v987 = vpack.c.bf16 %v958, %v957
        %v988 = vpack.c.bf16 %v960, %v959
        %v989 = vpack.c.bf16 %v962, %v961
        %v990 = vpack.c.bf16 %v964, %v963
        %v991 = vpack.c.bf16 %v966, %v965
        %v992 = vpack.c.bf16 %v968, %v967
        %v993 = vpack.c.bf16 %v970, %v969
        %v994 = vpack.c.bf16 %v972, %v971
        %v995 = vpack.c.bf16 %v974, %v973
        %v996 = vpack.c.bf16 %v976, %v975
        %v997 = vpack.c.bf16 %v978, %v977
        %v998 = vpack.c.bf16 %v980, %v979
        %v999 = vpack.c.bf16 %v982, %v981
        %v1000 = vpack.c.bf16 %v984, %v983
        %v1001 = vld [vmem:[%s5] sm:$0xf]
        %v1002 = vld [vmem:[%s5 + $0x4] sm:$0xf]
        %v1003 = vld [vmem:[%s5 + $0x8] sm:$0xf]
        %v1004 = vld [vmem:[%s5 + $0xc] sm:$0xf]
        %v1005 = vld [vmem:[%s6] sm:$0x1]
        %v1007 = vlaneseq
        %v1008 = vshrl.u32 %v1007, 7
        %v1009 = vsub.s32 0, %v1008
        %v1010 = vrot.slane %v1005, %v1009
        %v1016 = vunpack.c.l.b16 %v1001
        %v1017 = vunpack.c.l.b16 %v1002
        %v1018 = vunpack.c.l.b16 %v1003
        %v1019 = vunpack.c.l.b16 %v1004
        %v1020 = vpack.c.b16 %v1017, %v1016
        %v1021 = vpack.c.b16 %v1019, %v1018
        %v1025 = vsel %vm743, %v985, 0
        %v1028 = vsel %vm743, %v986, 0
        %v1031 = vsel %vm743, %v987, 0
        %v1034 = vsel %vm743, %v988, 0
        %v1037 = vsel %vm743, %v989, 0
        %v1040 = vsel %vm743, %v990, 0
        %v1043 = vsel %vm743, %v991, 0
        %v1046 = vsel %vm743, %v992, 0
        %v1049 = vsel %vm743, %v993, 0
        %v1052 = vsel %vm743, %v994, 0
        %v1055 = vsel %vm743, %v995, 0
        %v1058 = vsel %vm743, %v996, 0
        %v1061 = vsel %vm743, %v997, 0
        %v1064 = vsel %vm743, %v998, 0
        %v1067 = vsel %vm743, %v999, 0
        %v1070 = vsel %vm743, %v1000, 0
        %1072 = vmatprep.subr.bf16.mxu0 0
        %1073 = vmatpush1.bf16.msra.mxu0 %v1020
        %1074 = vmatprep.subr.bf16.mxu0 0
        %1075 = vmatpush1.bf16.msra.mxu0 %v1021
        %1076 = vmatprep.subr.bf16.mxu0 0
        %1077 = vmatpush1.bf16.msra.mxu0 0
        %1078 = vmatprep.subr.bf16.mxu0 0
        %1079 = vmatpush1.bf16.msra.mxu0 0
        %1080 = vmatprep.subr.bf16.mxu0 0
        %1081 = vmatpush1.bf16.msra.mxu0 0
        %1082 = vmatprep.subr.bf16.mxu0 0
        %1083 = vmatpush1.bf16.msra.mxu0 0
        %1084 = vmatprep.subr.bf16.mxu0 0
        %1085 = vmatpush1.bf16.msra.mxu0 0
        %1086 = vmatprep.subr.bf16.mxu0 0
        %1087 = vmatpush1.bf16.msra.mxu0 0
        %1088 = vmatprep.subr.bf16.mxu0 0
        %1089 = vmatpush1.bf16.msra.mxu0 0
        %1090 = vmatprep.subr.bf16.mxu0 0
        %1091 = vmatpush1.bf16.msra.mxu0 0
        %1092 = vmatprep.subr.bf16.mxu0 0
        %1093 = vmatpush1.bf16.msra.mxu0 0
        %1094 = vmatprep.subr.bf16.mxu0 0
        %1095 = vmatpush1.bf16.msra.mxu0 0
        %1096 = vmatprep.subr.bf16.mxu0 0
        %1097 = vmatpush1.bf16.msra.mxu0 0
        %1098 = vmatprep.subr.bf16.mxu0 0
        %1099 = vmatpush1.bf16.msra.mxu0 0
        %1100 = vmatprep.subr.bf16.mxu0 0
        %1101 = vmatpush1.bf16.msra.mxu0 0
        %1102 = vmatprep.subr.bf16.mxu0 0
        %1103 = vmatpush1.bf16.msra.mxu0 0
        %1104 = vmatprep.mubr.bf16.mxu0 0
        %1105 = vmatmul.mubr.bf16.gmra.mrb[0].mxu0 %v1025
        %v1106 = vpop.f32.mrb[0].mxu0
        %v1107 = vadd.f32 %v1010, %v1106
        %v1108 = vpop.f32.mrb[0].mxu0
        %v1109 = vpop.f32.mrb[0].mxu0
        %v1110 = vadd.f32 %v1010, %v1109
        %v1111 = vpop.f32.mrb[0].mxu0
        %1112 = vmatprep.mubr.bf16.mxu0 0
        %1113 = vmatmul.mubr.bf16.gmra.mrb[0].mxu0 %v1028
        %v1114 = vpop.f32.mrb[0].mxu0
        %v1115 = vadd.f32 %v1010, %v1114
        %v1116 = vpop.f32.mrb[0].mxu0
        %v1117 = vpop.f32.mrb[0].mxu0
        %v1118 = vadd.f32 %v1010, %v1117
        %v1119 = vpop.f32.mrb[0].mxu0
        %1120 = vmatprep.mubr.bf16.mxu0 0
        %1121 = vmatmul.mubr.bf16.gmra.mrb[0].mxu0 %v1031
        %v1122 = vpop.f32.mrb[0].mxu0
        %v1123 = vadd.f32 %v1010, %v1122
        %v1124 = vpop.f32.mrb[0].mxu0
        %v1125 = vpop.f32.mrb[0].mxu0
        %v1126 = vadd.f32 %v1010, %v1125
        %v1127 = vpop.f32.mrb[0].mxu0
        %1128 = vmatprep.mubr.bf16.mxu0 0
        %1129 = vmatmul.mubr.bf16.gmra.mrb[0].mxu0 %v1034
        %v1130 = vpop.f32.mrb[0].mxu0
        %v1131 = vadd.f32 %v1010, %v1130
        %v1132 = vpop.f32.mrb[0].mxu0
        %v1133 = vpop.f32.mrb[0].mxu0
        %v1134 = vadd.f32 %v1010, %v1133
        %v1135 = vpop.f32.mrb[0].mxu0
        %1136 = vmatprep.mubr.bf16.mxu0 0
        %1137 = vmatmul.mubr.bf16.gmra.mrb[0].mxu0 %v1037
        %v1138 = vpop.f32.mrb[0].mxu0
        %v1139 = vadd.f32 %v1010, %v1138
        %v1140 = vpop.f32.mrb[0].mxu0
        %v1141 = vpop.f32.mrb[0].mxu0
        %v1142 = vadd.f32 %v1010, %v1141
        %v1143 = vpop.f32.mrb[0].mxu0
        %1144 = vmatprep.mubr.bf16.mxu0 0
        %1145 = vmatmul.mubr.bf16.gmra.mrb[0].mxu0 %v1040
        %v1146 = vpop.f32.mrb[0].mxu0
        %v1147 = vadd.f32 %v1010, %v1146
        %v1148 = vpop.f32.mrb[0].mxu0
        %v1149 = vpop.f32.mrb[0].mxu0
        %v1150 = vadd.f32 %v1010, %v1149
        %v1151 = vpop.f32.mrb[0].mxu0
        %1152 = vmatprep.mubr.bf16.mxu0 0
        %1153 = vmatmul.mubr.bf16.gmra.mrb[0].mxu0 %v1043
        %v1154 = vpop.f32.mrb[0].mxu0
        %v1155 = vadd.f32 %v1010, %v1154
        %v1156 = vpop.f32.mrb[0].mxu0
        %v1157 = vpop.f32.mrb[0].mxu0
        %v1158 = vadd.f32 %v1010, %v1157
        %v1159 = vpop.f32.mrb[0].mxu0
        %1160 = vmatprep.mubr.bf16.mxu0 0
        %1161 = vmatmul.mubr.bf16.gmra.mrb[0].mxu0 %v1046
        %v1162 = vpop.f32.mrb[0].mxu0
        %v1163 = vadd.f32 %v1010, %v1162
        %v1164 = vpop.f32.mrb[0].mxu0
        %v1165 = vpop.f32.mrb[0].mxu0
        %v1166 = vadd.f32 %v1010, %v1165
        %v1167 = vpop.f32.mrb[0].mxu0
        %1168 = vmatprep.mubr.bf16.mxu0 0
        %1169 = vmatmul.mubr.bf16.gmra.mrb[0].mxu0 %v1049
        %v1170 = vpop.f32.mrb[0].mxu0
        %v1171 = vadd.f32 %v1010, %v1170
        %v1172 = vpop.f32.mrb[0].mxu0
        %v1173 = vpop.f32.mrb[0].mxu0
        %v1174 = vadd.f32 %v1010, %v1173
        %v1175 = vpop.f32.mrb[0].mxu0
        %1176 = vmatprep.mubr.bf16.mxu0 0
        %1177 = vmatmul.mubr.bf16.gmra.mrb[0].mxu0 %v1052
        %v1178 = vpop.f32.mrb[0].mxu0
        %v1179 = vadd.f32 %v1010, %v1178
        %v1180 = vpop.f32.mrb[0].mxu0
        %v1181 = vpop.f32.mrb[0].mxu0
        %v1182 = vadd.f32 %v1010, %v1181
        %v1183 = vpop.f32.mrb[0].mxu0
        %1184 = vmatprep.mubr.bf16.mxu0 0
        %1185 = vmatmul.mubr.bf16.gmra.mrb[0].mxu0 %v1055
        %v1186 = vpop.f32.mrb[0].mxu0
        %v1187 = vadd.f32 %v1010, %v1186
        %v1188 = vpop.f32.mrb[0].mxu0
        %v1189 = vpop.f32.mrb[0].mxu0
        %v1190 = vadd.f32 %v1010, %v1189
        %v1191 = vpop.f32.mrb[0].mxu0
        %1192 = vmatprep.mubr.bf16.mxu0 0
        %1193 = vmatmul.mubr.bf16.gmra.mrb[0].mxu0 %v1058
        %v1194 = vpop.f32.mrb[0].mxu0
        %v1195 = vadd.f32 %v1010, %v1194
        %v1196 = vpop.f32.mrb[0].mxu0
        %v1197 = vpop.f32.mrb[0].mxu0
        %v1198 = vadd.f32 %v1010, %v1197
        %v1199 = vpop.f32.mrb[0].mxu0
        %1200 = vmatprep.mubr.bf16.mxu0 0
        %1201 = vmatmul.mubr.bf16.gmra.mrb[0].mxu0 %v1061
        %v1202 = vpop.f32.mrb[0].mxu0
        %v1203 = vadd.f32 %v1010, %v1202
        %v1204 = vpop.f32.mrb[0].mxu0
        %v1205 = vpop.f32.mrb[0].mxu0
        %v1206 = vadd.f32 %v1010, %v1205
        %v1207 = vpop.f32.mrb[0].mxu0
        %1208 = vmatprep.mubr.bf16.mxu0 0
        %1209 = vmatmul.mubr.bf16.gmra.mrb[0].mxu0 %v1064
        %v1210 = vpop.f32.mrb[0].mxu0
        %v1211 = vadd.f32 %v1010, %v1210
        %v1212 = vpop.f32.mrb[0].mxu0
        %v1213 = vpop.f32.mrb[0].mxu0
        %v1214 = vadd.f32 %v1010, %v1213
        %v1215 = vpop.f32.mrb[0].mxu0
        %1216 = vmatprep.mubr.bf16.mxu0 0
        %1217 = vmatmul.mubr.bf16.gmra.mrb[0].mxu0 %v1067
        %v1218 = vpop.f32.mrb[0].mxu0
        %v1219 = vadd.f32 %v1010, %v1218
        %v1220 = vpop.f32.mrb[0].mxu0
        %v1221 = vpop.f32.mrb[0].mxu0
        %v1222 = vadd.f32 %v1010, %v1221
        %v1223 = vpop.f32.mrb[0].mxu0
        %1224 = vmatprep.mubr.bf16.mxu0 0
        %1225 = vmatmul.mubr.bf16.gmra.mrb[0].mxu0 %v1070
        %v1226 = vpop.f32.mrb[0].mxu0
        %v1227 = vadd.f32 %v1010, %v1226
        %v1228 = vpop.f32.mrb[0].mxu0
        %v1229 = vpop.f32.mrb[0].mxu0
        %v1230 = vadd.f32 %v1010, %v1229
        %v1231 = vpop.f32.mrb[0].mxu0
        %1232 = vdwg.mxu0
        %v1233 = vmax.f32 %v1107, 0.0
        %v1234 = vmax.f32 %v1110, 0.0
        %v1235 = vmax.f32 %v1115, 0.0
        %v1236 = vmax.f32 %v1118, 0.0
        %v1237 = vmax.f32 %v1123, 0.0
        %v1238 = vmax.f32 %v1126, 0.0
        %v1239 = vmax.f32 %v1131, 0.0
        %v1240 = vmax.f32 %v1134, 0.0
        %v1241 = vmax.f32 %v1139, 0.0
        %v1242 = vmax.f32 %v1142, 0.0
        %v1243 = vmax.f32 %v1147, 0.0
        %v1244 = vmax.f32 %v1150, 0.0
        %v1245 = vmax.f32 %v1155, 0.0
        %v1246 = vmax.f32 %v1158, 0.0
        %v1247 = vmax.f32 %v1163, 0.0
        %v1248 = vmax.f32 %v1166, 0.0
        %v1249 = vmax.f32 %v1171, 0.0
        %v1250 = vmax.f32 %v1174, 0.0
        %v1251 = vmax.f32 %v1179, 0.0
        %v1252 = vmax.f32 %v1182, 0.0
        %v1253 = vmax.f32 %v1187, 0.0
        %v1254 = vmax.f32 %v1190, 0.0
        %v1255 = vmax.f32 %v1195, 0.0
        %v1256 = vmax.f32 %v1198, 0.0
        %v1257 = vmax.f32 %v1203, 0.0
        %v1258 = vmax.f32 %v1206, 0.0
        %v1259 = vmax.f32 %v1211, 0.0
        %v1260 = vmax.f32 %v1214, 0.0
        %v1261 = vmax.f32 %v1219, 0.0
        %v1262 = vmax.f32 %v1222, 0.0
        %v1263 = vmax.f32 %v1227, 0.0
        %v1264 = vmax.f32 %v1230, 0.0
        %v1265 = vpack.c.bf16 %v1234, %v1233
        %v1266 = vpack.c.bf16 %v1236, %v1235
        %v1267 = vpack.c.bf16 %v1238, %v1237
        %v1268 = vpack.c.bf16 %v1240, %v1239
        %v1269 = vpack.c.bf16 %v1242, %v1241
        %v1270 = vpack.c.bf16 %v1244, %v1243
        %v1271 = vpack.c.bf16 %v1246, %v1245
        %v1272 = vpack.c.bf16 %v1248, %v1247
        %v1273 = vpack.c.bf16 %v1250, %v1249
        %v1274 = vpack.c.bf16 %v1252, %v1251
        %v1275 = vpack.c.bf16 %v1254, %v1253
        %v1276 = vpack.c.bf16 %v1256, %v1255
        %v1277 = vpack.c.bf16 %v1258, %v1257
        %v1278 = vpack.c.bf16 %v1260, %v1259
        %v1279 = vpack.c.bf16 %v1262, %v1261
        %v1280 = vpack.c.bf16 %v1264, %v1263
        %v1281 = vld [vmem:[%s7] sm:$0xf]
        %v1282 = vld [vmem:[%s7 + $0x4] sm:$0xf]
        %v1283 = vld [vmem:[%s7 + $0x8] sm:$0xf]
        %v1284 = vld [vmem:[%s7 + $0xc] sm:$0xf]
        %v1285 = vld [vmem:[%s8] sm:$0x1]
        %v1287 = vlaneseq
        %v1288 = vshrl.u32 %v1287, 7
        %v1289 = vsub.s32 0, %v1288
        %v1290 = vrot.slane %v1285, %v1289
        %v1296 = vunpack.c.l.b16 %v1281
        %v1297 = vunpack.c.l.b16 %v1282
        %v1298 = vunpack.c.l.b16 %v1283
        %v1299 = vunpack.c.l.b16 %v1284
        %v1300 = vpack.c.b16 %v1297, %v1296
        %v1301 = vpack.c.b16 %v1299, %v1298
        %v1305 = vsel %vm743, %v1265, 0
        %v1308 = vsel %vm743, %v1266, 0
        %v1311 = vsel %vm743, %v1267, 0
        %v1314 = vsel %vm743, %v1268, 0
        %v1317 = vsel %vm743, %v1269, 0
        %v1320 = vsel %vm743, %v1270, 0
        %v1323 = vsel %vm743, %v1271, 0
        %v1326 = vsel %vm743, %v1272, 0
        %v1329 = vsel %vm743, %v1273, 0
        %v1332 = vsel %vm743, %v1274, 0
        %v1335 = vsel %vm743, %v1275, 0
        %v1338 = vsel %vm743, %v1276, 0
        %v1341 = vsel %vm743, %v1277, 0
        %v1344 = vsel %vm743, %v1278, 0
        %v1347 = vsel %vm743, %v1279, 0
        %v1350 = vsel %vm743, %v1280, 0
        %1352 = vmatprep.subr.bf16.mxu0 0
        %1353 = vmatpush1.bf16.msra.mxu0 %v1300
        %1354 = vmatprep.subr.bf16.mxu0 0
        %1355 = vmatpush1.bf16.msra.mxu0 %v1301
        %1356 = vmatprep.subr.bf16.mxu0 0
        %1357 = vmatpush1.bf16.msra.mxu0 0
        %1358 = vmatprep.subr.bf16.mxu0 0
        %1359 = vmatpush1.bf16.msra.mxu0 0
        %1360 = vmatprep.subr.bf16.mxu0 0
        %1361 = vmatpush1.bf16.msra.mxu0 0
        %1362 = vmatprep.subr.bf16.mxu0 0
        %1363 = vmatpush1.bf16.msra.mxu0 0
        %1364 = vmatprep.subr.bf16.mxu0 0
        %1365 = vmatpush1.bf16.msra.mxu0 0
        %1366 = vmatprep.subr.bf16.mxu0 0
        %1367 = vmatpush1.bf16.msra.mxu0 0
        %1368 = vmatprep.subr.bf16.mxu0 0
        %1369 = vmatpush1.bf16.msra.mxu0 0
        %1370 = vmatprep.subr.bf16.mxu0 0
        %1371 = vmatpush1.bf16.msra.mxu0 0
        %1372 = vmatprep.subr.bf16.mxu0 0
        %1373 = vmatpush1.bf16.msra.mxu0 0
        %1374 = vmatprep.subr.bf16.mxu0 0
        %1375 = vmatpush1.bf16.msra.mxu0 0
        %1376 = vmatprep.subr.bf16.mxu0 0
        %1377 = vmatpush1.bf16.msra.mxu0 0
        %1378 = vmatprep.subr.bf16.mxu0 0
        %1379 = vmatpush1.bf16.msra.mxu0 0
        %1380 = vmatprep.subr.bf16.mxu0 0
        %1381 = vmatpush1.bf16.msra.mxu0 0
        %1382 = vmatprep.subr.bf16.mxu0 0
        %1383 = vmatpush1.bf16.msra.mxu0 0
        %1384 = vmatprep.mubr.bf16.mxu0 0
        %1385 = vmatmul.mubr.bf16.gmra.mrb[0].mxu0 %v1305
        %v1386 = vpop.f32.mrb[0].mxu0
        %v1387 = vadd.f32 %v1290, %v1386
        %v1388 = vpop.f32.mrb[0].mxu0
        %v1389 = vpop.f32.mrb[0].mxu0
        %v1390 = vadd.f32 %v1290, %v1389
        %v1391 = vpop.f32.mrb[0].mxu0
        %1392 = vmatprep.mubr.bf16.mxu0 0
        %1393 = vmatmul.mubr.bf16.gmra.mrb[0].mxu0 %v1308
        %v1394 = vpop.f32.mrb[0].mxu0
        %v1395 = vadd.f32 %v1290, %v1394
        %v1396 = vpop.f32.mrb[0].mxu0
        %v1397 = vpop.f32.mrb[0].mxu0
        %v1398 = vadd.f32 %v1290, %v1397
        %v1399 = vpop.f32.mrb[0].mxu0
        %1400 = vmatprep.mubr.bf16.mxu0 0
        %1401 = vmatmul.mubr.bf16.gmra.mrb[0].mxu0 %v1311
        %v1402 = vpop.f32.mrb[0].mxu0
        %v1403 = vadd.f32 %v1290, %v1402
        %v1404 = vpop.f32.mrb[0].mxu0
        %v1405 = vpop.f32.mrb[0].mxu0
        %v1406 = vadd.f32 %v1290, %v1405
        %v1407 = vpop.f32.mrb[0].mxu0
        %1408 = vmatprep.mubr.bf16.mxu0 0
        %1409 = vmatmul.mubr.bf16.gmra.mrb[0].mxu0 %v1314
        %v1410 = vpop.f32.mrb[0].mxu0
        %v1411 = vadd.f32 %v1290, %v1410
        %v1412 = vpop.f32.mrb[0].mxu0
        %v1413 = vpop.f32.mrb[0].mxu0
        %v1414 = vadd.f32 %v1290, %v1413
        %v1415 = vpop.f32.mrb[0].mxu0
        %1416 = vmatprep.mubr.bf16.mxu0 0
        %1417 = vmatmul.mubr.bf16.gmra.mrb[0].mxu0 %v1317
        %v1418 = vpop.f32.mrb[0].mxu0
        %v1419 = vadd.f32 %v1290, %v1418
        %v1420 = vpop.f32.mrb[0].mxu0
        %v1421 = vpop.f32.mrb[0].mxu0
        %v1422 = vadd.f32 %v1290, %v1421
        %v1423 = vpop.f32.mrb[0].mxu0
        %1424 = vmatprep.mubr.bf16.mxu0 0
        %1425 = vmatmul.mubr.bf16.gmra.mrb[0].mxu0 %v1320
        %v1426 = vpop.f32.mrb[0].mxu0
        %v1427 = vadd.f32 %v1290, %v1426
        %v1428 = vpop.f32.mrb[0].mxu0
        %v1429 = vpop.f32.mrb[0].mxu0
        %v1430 = vadd.f32 %v1290, %v1429
        %v1431 = vpop.f32.mrb[0].mxu0
        %1432 = vmatprep.mubr.bf16.mxu0 0
        %1433 = vmatmul.mubr.bf16.gmra.mrb[0].mxu0 %v1323
        %v1434 = vpop.f32.mrb[0].mxu0
        %v1435 = vadd.f32 %v1290, %v1434
        %v1436 = vpop.f32.mrb[0].mxu0
        %v1437 = vpop.f32.mrb[0].mxu0
        %v1438 = vadd.f32 %v1290, %v1437
        %v1439 = vpop.f32.mrb[0].mxu0
        %1440 = vmatprep.mubr.bf16.mxu0 0
        %1441 = vmatmul.mubr.bf16.gmra.mrb[0].mxu0 %v1326
        %v1442 = vpop.f32.mrb[0].mxu0
        %v1443 = vadd.f32 %v1290, %v1442
        %v1444 = vpop.f32.mrb[0].mxu0
        %v1445 = vpop.f32.mrb[0].mxu0
        %v1446 = vadd.f32 %v1290, %v1445
        %v1447 = vpop.f32.mrb[0].mxu0
        %1448 = vmatprep.mubr.bf16.mxu0 0
        %1449 = vmatmul.mubr.bf16.gmra.mrb[0].mxu0 %v1329
        %v1450 = vpop.f32.mrb[0].mxu0
        %v1451 = vadd.f32 %v1290, %v1450
        %v1452 = vpop.f32.mrb[0].mxu0
        %v1453 = vpop.f32.mrb[0].mxu0
        %v1454 = vadd.f32 %v1290, %v1453
        %v1455 = vpop.f32.mrb[0].mxu0
        %1456 = vmatprep.mubr.bf16.mxu0 0
        %1457 = vmatmul.mubr.bf16.gmra.mrb[0].mxu0 %v1332
        %v1458 = vpop.f32.mrb[0].mxu0
        %v1459 = vadd.f32 %v1290, %v1458
        %v1460 = vpop.f32.mrb[0].mxu0
        %v1461 = vpop.f32.mrb[0].mxu0
        %v1462 = vadd.f32 %v1290, %v1461
        %v1463 = vpop.f32.mrb[0].mxu0
        %1464 = vmatprep.mubr.bf16.mxu0 0
        %1465 = vmatmul.mubr.bf16.gmra.mrb[0].mxu0 %v1335
        %v1466 = vpop.f32.mrb[0].mxu0
        %v1467 = vadd.f32 %v1290, %v1466
        %v1468 = vpop.f32.mrb[0].mxu0
        %v1469 = vpop.f32.mrb[0].mxu0
        %v1470 = vadd.f32 %v1290, %v1469
        %v1471 = vpop.f32.mrb[0].mxu0
        %1472 = vmatprep.mubr.bf16.mxu0 0
        %1473 = vmatmul.mubr.bf16.gmra.mrb[0].mxu0 %v1338
        %v1474 = vpop.f32.mrb[0].mxu0
        %v1475 = vadd.f32 %v1290, %v1474
        %v1476 = vpop.f32.mrb[0].mxu0
        %v1477 = vpop.f32.mrb[0].mxu0
        %v1478 = vadd.f32 %v1290, %v1477
        %v1479 = vpop.f32.mrb[0].mxu0
        %1480 = vmatprep.mubr.bf16.mxu0 0
        %1481 = vmatmul.mubr.bf16.gmra.mrb[0].mxu0 %v1341
        %v1482 = vpop.f32.mrb[0].mxu0
        %v1483 = vadd.f32 %v1290, %v1482
        %v1484 = vpop.f32.mrb[0].mxu0
        %v1485 = vpop.f32.mrb[0].mxu0
        %v1486 = vadd.f32 %v1290, %v1485
        %v1487 = vpop.f32.mrb[0].mxu0
        %1488 = vmatprep.mubr.bf16.mxu0 0
        %1489 = vmatmul.mubr.bf16.gmra.mrb[0].mxu0 %v1344
        %v1490 = vpop.f32.mrb[0].mxu0
        %v1491 = vadd.f32 %v1290, %v1490
        %v1492 = vpop.f32.mrb[0].mxu0
        %v1493 = vpop.f32.mrb[0].mxu0
        %v1494 = vadd.f32 %v1290, %v1493
        %v1495 = vpop.f32.mrb[0].mxu0
        %1496 = vmatprep.mubr.bf16.mxu0 0
        %1497 = vmatmul.mubr.bf16.gmra.mrb[0].mxu0 %v1347
        %v1498 = vpop.f32.mrb[0].mxu0
        %v1499 = vadd.f32 %v1290, %v1498
        %v1500 = vpop.f32.mrb[0].mxu0
        %v1501 = vpop.f32.mrb[0].mxu0
        %v1502 = vadd.f32 %v1290, %v1501
        %v1503 = vpop.f32.mrb[0].mxu0
        %1504 = vmatprep.mubr.bf16.mxu0 0
        %1505 = vmatmul.mubr.bf16.gmra.mrb[0].mxu0 %v1350
        %v1506 = vpop.f32.mrb[0].mxu0
        %v1507 = vadd.f32 %v1290, %v1506
        %v1508 = vpop.f32.mrb[0].mxu0
        %v1509 = vpop.f32.mrb[0].mxu0
        %v1510 = vadd.f32 %v1290, %v1509
        %v1511 = vpop.f32.mrb[0].mxu0
        %1512 = vdwg.mxu0
        %1513 = vst [vmem:[%s326] sm:$0xff] %v1387
        %1514 = vst [vmem:[%s326 + $0x8] sm:$0xff] %v1390
        %1515 = vst [vmem:[%s326 + $0x10] sm:$0xff] %v1395
        %1516 = vst [vmem:[%s326 + $0x18] sm:$0xff] %v1398
        %1517 = vst [vmem:[%s326 + $0x20] sm:$0xff] %v1403
        %1518 = vst [vmem:[%s326 + $0x28] sm:$0xff] %v1406
        %1519 = vst [vmem:[%s326 + $0x30] sm:$0xff] %v1411
        %1520 = vst [vmem:[%s326 + $0x38] sm:$0xff] %v1414
        %1521 = vst [vmem:[%s326 + $0x40] sm:$0xff] %v1419
        %1522 = vst [vmem:[%s326 + $0x48] sm:$0xff] %v1422
        %1523 = vst [vmem:[%s326 + $0x50] sm:$0xff] %v1427
        %1524 = vst [vmem:[%s326 + $0x58] sm:$0xff] %v1430
        %1525 = vst [vmem:[%s326 + $0x60] sm:$0xff] %v1435
        %1526 = vst [vmem:[%s326 + $0x68] sm:$0xff] %v1438
        %1527 = vst [vmem:[%s326 + $0x70] sm:$0xff] %v1443
        %1528 = vst [vmem:[%s326 + $0x78] sm:$0xff] %v1446
        %1529 = vst [vmem:[%s326 + $0x80] sm:$0xff] %v1451
        %1530 = vst [vmem:[%s326 + $0x88] sm:$0xff] %v1454
        %1531 = vst [vmem:[%s326 + $0x90] sm:$0xff] %v1459
        %1532 = vst [vmem:[%s326 + $0x98] sm:$0xff] %v1462
        %1533 = vst [vmem:[%s326 + $0xa0] sm:$0xff] %v1467
        %1534 = vst [vmem:[%s326 + $0xa8] sm:$0xff] %v1470
        %1535 = vst [vmem:[%s326 + $0xb0] sm:$0xff] %v1475
        %1536 = vst [vmem:[%s326 + $0xb8] sm:$0xff] %v1478
        %1537 = vst [vmem:[%s326 + $0xc0] sm:$0xff] %v1483
        %1538 = vst [vmem:[%s326 + $0xc8] sm:$0xff] %v1486
        %1539 = vst [vmem:[%s326 + $0xd0] sm:$0xff] %v1491
        %1540 = vst [vmem:[%s326 + $0xd8] sm:$0xff] %v1494
        %1541 = vst [vmem:[%s326 + $0xe0] sm:$0xff] %v1499
        %1542 = vst [vmem:[%s326 + $0xe8] sm:$0xff] %v1502
        %1543 = vst [vmem:[%s326 + $0xf0] sm:$0xff] %v1507
        %1544 = vst [vmem:[%s326 + $0xf8] sm:$0xff] %v1510
        %s1545 = sand.u32 %s225, 1
        %s1546 = scalar_lea.sflag [#allocation3], %s1545
        %s1547 = sand.u32 %s225, 1
        %s1548 = smul.addr %s1547, 256
        %s1549 = scalar_lea.vmem [#allocation2], %s1548
        // Predicated region
        $region57: #{tpu_custom_call.1} parent=55 // pred_check
          %p1550 = pneg %p235
        $region58: #{tpu_custom_call.1} parent=55 // pred_check_branch
          %1552 = sbr.rel (%p1550) target = $region60
        $region59: #{tpu_custom_call.1} parent=55 // pred_region
          %s1553 = smul.u32 32, %s23
          %s1555 = ssub.s32 4096, 4096
          %1556 = vsyncadd %s1546, %s1555
          %s1557 = smul.addr %s1553, 128
          %s1558 = scalar_lea.hbm %s9, %s1557
          %s1559 = sshll.u32 %s1549, 4
          %s1560 = int_to_ptr.vmem [resolvable:$true] %s1559
          %1565 = dma.vmem_to_hbm [thread:$0]  %s1560, 4096, %s1558, %s1546, 128, 128, 8
        $region60: #{tpu_custom_call.1} parent=55 // pred_fallthru
          _
      $region56: #{tpu_custom_call.1} parent=5 // pred_fallthru
        _
      %p1566 = scmp.le.s32.totalorder 2, %s18
      // Predicated region
      $region61: #{tpu_custom_call.1} parent=5 // pred_check
        %p1567 = pneg %p1566
      $region62: #{tpu_custom_call.1} parent=5 // pred_check_branch
        %1569 = sbr.rel (%p1567) target = $region64
      $region63: #{tpu_custom_call.1} parent=5 // pred_region
        %s1570 = ssub.s32 %s18, 2
        // Predicated region
        $region65: #{tpu_custom_call.1} parent=63 // pred_check
          %p1571 = pneg %p241
        $region66: #{tpu_custom_call.1} parent=63 // pred_check_branch
          %1573 = sbr.rel (%p1571) target = $region68
        $region67: #{tpu_custom_call.1} parent=63 // pred_region
          %s1574 = sand.u32 %s226, 1
          %s1575 = scalar_lea.sflag [#allocation3], %s1574
          %s1576 = sand.u32 %s226, 1
          %s1577 = smul.addr %s1576, 256
          %s1578 = scalar_lea.vmem [#allocation2], %s1577
          %1579 = dma.done %s1575, 4096
        $region68: #{tpu_custom_call.1} parent=63 // pred_fallthru
          _
      $region64: #{tpu_custom_call.1} parent=5 // pred_fallthru
        _
    $region6: #{tpu_custom_call.1} parent=1 // loop_footer
      %s22 = sadd.s32 1, %s18
    $region7: #{tpu_custom_call.1} parent=1 // loop_footer_branch
      %17 = sbr.rel target = $region3
    $region8: #{tpu_custom_call.1} parent=1 // loop_exit
      _
    %1580 = vsyncpa [#allocation3], 1
    %s1581 = scalar_lea.sflag [#allocation3], 1
    %1582 = vsyncpa %s1581, 1

</llo_original>
